<compile_context>
chip_gen: v7x
topology: tpu7x:2x2x1
jax: 0.10.0
libtpu: 0.0.40
codegen_flags: <defaults>
</compile_context>

<pallas_src>
import functools

import jax
import jax.numpy as jnp
from jax.experimental import pallas as pl
from jax.experimental.pallas import tpu as pltpu

BN_EPS = 1e-5
LEAKY_SLOPE = 0.1


def _vmem_limit_bytes():
    """Generation-aware VMEM budget: ~75% of per-core VMEM, capped at 100 MiB."""
    try:
        cap = pltpu.get_tpu_info().vmem_capacity_bytes
    except Exception:
        cap = 64 * 1024 * 1024  # conservative (v7x per-TC) fallback
    return int(min(cap * 3 // 4, 100 * 1024 * 1024))


def _conv_stats_kernel(x_ref, w_ref, g_ref, b_ref,
                       conv_ref, scale_ref, shift_ref,
                       sum_ref, sq_ref, *,
                       b_tile, oh, ow, cin, cout, k, stride, w_in, m_total):
    """Fused im2col conv (MXU) + per-channel sum/sumsq + BN scale/shift fold.

    x_ref:    (b_tile, Hp, Wp*Cin)        bf16 padded input images
    w_ref:    (K*K, WIN*Cin, OW*Cout)     bf16 per-tap block-diagonal weights
    g_ref/b_ref: (1, Cout)                f32 BN gamma / beta
    conv_ref: (b_tile, OH, OW*Cout)       bf16 conv output (lane-dense)
    scale_ref/shift_ref: (1, Cout)        f32 folded BN scale/shift (last step)
    sum_ref/sq_ref: (1, OW*Cout)          f32 VMEM accumulators (persist across steps)
    """
    i = pl.program_id(0)

    @pl.when(i == 0)
    def _init():
        sum_ref[...] = jnp.zeros_like(sum_ref)
        sq_ref[...] = jnp.zeros_like(sq_ref)

    for b in range(b_tile):                       # static unroll (b_tile is small)
        acc = jnp.zeros((oh, ow * cout), jnp.float32)
        xb = x_ref[b]                             # (Hp, Wp*Cin) bf16, loaded once
        t = 0
        for ki in range(k):
            for kj in range(k):
                c0 = kj * cin
                if stride == 1:
                    tap = xb[ki:ki + oh, c0:c0 + ow * cin]
                else:
                    # strided row window; column stride is folded into w_ref's
                    # block-diagonal selection matrix.
                    tap = x_ref[b, pl.ds(ki, oh, stride), pl.ds(c0, w_in * cin)]
                acc = acc + jnp.dot(tap, w_ref[t],
                                    preferred_element_type=jnp.float32)
                t += 1
        # BN statistics from the f32 accumulator (before the bf16 cast).
        sum_ref[...] += jnp.sum(acc, axis=0, keepdims=True)
        sq_ref[...] += jnp.sum(acc * acc, axis=0, keepdims=True)
        conv_ref[b] = acc.astype(conv_ref.dtype)

    @pl.when(i == pl.num_programs(0) - 1)
    def _finalize():
        # Reduce the per-(ow, co) lane accumulators over ow -> per-channel sums.
        # (Static lane slices; for very large OW a ones-row matmul would scale better.)
        s_all = sum_ref[...]
        q_all = sq_ref[...]
        ch_sum = jnp.zeros((1, cout), jnp.float32)
        ch_sq = jnp.zeros((1, cout), jnp.float32)
        for o in range(ow):
            sl = slice(o * cout, (o + 1) * cout)
            ch_sum = ch_sum + s_all[:, sl]
            ch_sq = ch_sq + q_all[:, sl]
        inv_m = 1.0 / m_total                     # true element count (padded imgs are 0)
        mean = ch_sum * inv_m
        var = jnp.maximum(ch_sq * inv_m - mean * mean, 0.0)   # biased var (training BN)
        s = g_ref[...] * jax.lax.rsqrt(var + BN_EPS)
        scale_ref[...] = s
        shift_ref[...] = b_ref[...] - mean * s


def _bn_act_kernel(conv_ref, scale_ref, shift_ref, o_ref):
    """y = conv * scale + shift, LeakyReLU(0.1). bf16 in, upcast in-register, f32 out."""
    y = conv_ref[...].astype(jnp.float32) * scale_ref[...] + shift_ref[...]
    o_ref[...] = jnp.where(y > 0, y, LEAKY_SLOPE * y).astype(o_ref.dtype)


def _ceil(a, b):
    return -(-a // b)


@functools.partial(jax.jit, static_argnames=("stride",))
def basic_block_forward(x_nchw, w_oihw, gamma, beta, *, stride):
    """x_nchw: (N, Cin, H, W); w_oihw: (Cout, Cin, K, K); gamma/beta: (Cout,)."""
    N, Cin, H, W = x_nchw.shape
    Cout, _, K, _ = w_oihw.shape
    pad = (K - 1) // 2
    OH = (H + 2 * pad - K) // stride + 1
    OW = (W + 2 * pad - K) // stride + 1
    Hp, Wp = H + 2 * pad, W + 2 * pad
    WIN = (OW - 1) * stride + 1                   # input-column window per tap

    # ---- layout & weight prep (tiny XLA ops) ------------------------------------
    # TODO(synk): keep callers NHWC to drop this boundary transpose.
    x_nhwc = jnp.transpose(x_nchw, (0, 2, 3, 1)).astype(jnp.bfloat16)
    x_pad = jnp.pad(x_nhwc, ((0, 0), (pad, pad), (pad, pad), (0, 0)))
    x2d = x_pad.reshape(N, Hp, Wp * Cin)          # lane axis = Wp*Cin

    # Per-tap block-diagonal weights: (OH, WIN*Cin) @ w_bd[t] -> (OH, OW*Cout),
    # i.e. the conv result is produced directly in the lane-dense layout.
    sel = jnp.zeros((WIN, OW), jnp.float32)
    sel = sel.at[jnp.arange(OW) * stride, jnp.arange(OW)].set(1.0)   # stride selection
    w_taps = jnp.transpose(w_oihw, (2, 3, 1, 0)).astype(jnp.float32)  # (K, K, Cin, Cout)
    w_bd = jnp.stack([jnp.kron(sel, w_taps[ki, kj])
                      for ki in range(K) for kj in range(K)], axis=0)
    w_bd = w_bd.astype(jnp.bfloat16)              # (K*K, WIN*Cin, OW*Cout)

    # ---- generation-aware tile sizing --------------------------------------------
    vmem_limit = _vmem_limit_bytes()
    budget = vmem_limit // 2                      # headroom for Mosaic-internal scratch
    lane = 128
    x_blk = Hp * _ceil(Wp * Cin, lane) * lane * 2
    conv_blk = OH * _ceil(OW * Cout, lane) * lane * 2
    acc_blk = OH * _ceil(OW * Cout, lane) * lane * 4
    w_bytes = K * K * WIN * Cin * _ceil(OW * Cout, lane) * lane * 2
    per_img = 2 * x_blk + 2 * conv_blk + acc_blk  # double-buffered in/out blocks
    b_fit = max(1, (budget - w_bytes) // max(per_img, 1))
    B_TILE = int(max(1, min(N, b_fit, 8)))        # cap the static per-image unroll
    n_tiles = _ceil(N, B_TILE)
    n_pad = n_tiles * B_TILE
    if n_pad != N:                                # zero images: contribute 0 to stats
        x2d = jnp.pad(x2d, ((0, n_pad - N), (0, 0), (0, 0)))

    gamma2d = gamma.reshape(1, Cout).astype(jnp.float32)
    beta2d = beta.reshape(1, Cout).astype(jnp.float32)
    m_total = float(N * OH * OW)                  # true count (excludes padded images)

    kern1 = functools.partial(
        _conv_stats_kernel, b_tile=B_TILE, oh=OH, ow=OW, cin=Cin, cout=Cout,
        k=K, stride=stride, w_in=WIN, m_total=m_total)

    # ---- Pass 1: fused conv + BN statistics (sequential over image tiles) --------
    conv, scale, shift = pl.pallas_call(
        kern1,
        out_shape=(jax.ShapeDtypeStruct((n_pad, OH, OW * Cout), jnp.bfloat16),
                   jax.ShapeDtypeStruct((1, Cout), jnp.float32),
                   jax.ShapeDtypeStruct((1, Cout), jnp.float32)),
        grid=(n_tiles,),
        in_specs=[
            pl.BlockSpec((B_TILE, Hp, Wp * Cin), lambda i: (i, 0, 0)),
            pl.BlockSpec((K * K, WIN * Cin, OW * Cout), lambda i: (0, 0, 0)),
            pl.BlockSpec((1, Cout), lambda i: (0, 0)),
            pl.BlockSpec((1, Cout), lambda i: (0, 0)),
        ],
        out_specs=(
            pl.BlockSpec((B_TILE, OH, OW * Cout), lambda i: (i, 0, 0)),
            pl.BlockSpec((1, Cout), lambda i: (0, 0)),
            pl.BlockSpec((1, Cout), lambda i: (0, 0)),
        ),
        scratch_shapes=[pltpu.VMEM((1, OW * Cout), jnp.float32),
                        pltpu.VMEM((1, OW * Cout), jnp.float32)],
        compiler_params=pltpu.CompilerParams(
            dimension_semantics=("arbitrary",),    # sequential stats accumulation
            vmem_limit_bytes=vmem_limit),
    )(x2d, w_bd, gamma2d, beta2d)

    # ---- Pass 2: normalize + LeakyReLU (lane-dense, data-parallel) ---------------
    R = n_pad * OH
    conv_rows = conv.reshape(R, OW * Cout)        # row-major collapse: no data movement
    scale_t = jnp.tile(scale, (1, OW))            # per-(ow, co) lane vectors
    shift_t = jnp.tile(shift, (1, OW))

    per_row = _ceil(OW * Cout, lane) * lane * (2 + 4) * 2
    row_cap = max(8, (budget // max(per_row, 1)) // 8 * 8)
    if R <= row_cap:
        TILE_R, r_tiles, r_pad = R, 1, R          # small problem -> single grid step
    else:
        TILE_R = row_cap
        r_tiles = _ceil(R, TILE_R)
        r_pad = r_tiles * TILE_R
        conv_rows = jnp.pad(conv_rows, ((0, r_pad - R), (0, 0)))

    y = pl.pallas_call(
        _bn_act_kernel,
        out_shape=jax.ShapeDtypeStruct((r_pad, OW * Cout), jnp.float32),
        grid=(r_tiles,),
        in_specs=[
            pl.BlockSpec((TILE_R, OW * Cout), lambda i: (i, 0)),
            pl.BlockSpec((1, OW * Cout), lambda i: (0, 0)),
            pl.BlockSpec((1, OW * Cout), lambda i: (0, 0)),
        ],
        out_specs=pl.BlockSpec((TILE_R, OW * Cout), lambda i: (i, 0)),
        compiler_params=pltpu.CompilerParams(
            dimension_semantics=("parallel",),     # megacore-shardable on v7x
            vmem_limit_bytes=vmem_limit),
    )(conv_rows, scale_t, shift_t)

    out_nhwc = y[:N * OH].reshape(N, OH, OW, Cout)
    # TODO(synk): boundary transpose kept only to match the PyTorch NCHW interface.
    return jnp.transpose(out_nhwc, (0, 3, 1, 2)).astype(x_nchw.dtype)


def _reference(x, w, gamma, beta, stride):
    # Same numerics as the kernels: bf16 conv operands, f32 accumulation, f32 BN
    # with biased variance (training-mode BatchNorm), LeakyReLU(0.1).
    K = w.shape[2]
    pad = (K - 1) // 2
    conv = jax.lax.conv_general_dilated(
        x.astype(jnp.bfloat16), w.astype(jnp.bfloat16),
        window_strides=(stride, stride),
        padding=[(pad, pad), (pad, pad)],
        dimension_numbers=("NCHW", "OIHW", "NCHW"),
        preferred_element_type=jnp.float32)
    mean = conv.mean(axis=(0, 2, 3), keepdims=True)
    var = ((conv - mean) ** 2).mean(axis=(0, 2, 3), keepdims=True)
    norm = (conv - mean) * jax.lax.rsqrt(var + BN_EPS)
    y = norm * gamma.reshape(1, -1, 1, 1) + beta.reshape(1, -1, 1, 1)
    return jnp.where(y > 0, y, LEAKY_SLOPE * y)


if __name__ == "__main__":
    # Module config: BasicBlock(in_planes=4, planes=8, kernel_size=3, stride=1)
    in_planes, planes, kernel_size, stride = 4, 8, 3, 1
    N, H, W = 2, 16, 16

    key = jax.random.PRNGKey(0)
    kx, kw = jax.random.split(key)
    x = jax.random.normal(kx, (N, in_planes, H, W), dtype=jnp.float32)
    conv_w = jax.random.normal(kw, (planes, in_planes, kernel_size, kernel_size),
                               dtype=jnp.float32) * 0.1
    gamma = jnp.ones((planes,), dtype=jnp.float32)   # BatchNorm2d default weight init
    beta = jnp.zeros((planes,), dtype=jnp.float32)   # BatchNorm2d default bias init

    out = basic_block_forward(x, conv_w, gamma, beta, stride=stride)
    out = jax.block_until_ready(out)

    ref = _reference(x, conv_w, gamma, beta, stride)
    assert out.shape == (N, planes, H, W), out.shape
    err = float(jnp.abs(out - ref).max())
    assert jnp.allclose(out, ref, atol=5e-3, rtol=5e-3), err

    print("KERNEL_OK")
</pallas_src>

<mosaic_0001>
module attributes {stable_mosaic.version = 11 : i64} {
  func.func @_conv_stats_kernel(%arg0: i32, %arg1: memref<2x18x72xbf16, #tpu.memory_space<vmem>>, %arg2: memref<9x64x128xbf16, #tpu.memory_space<vmem>>, %arg3: memref<1x8xf32, #tpu.memory_space<vmem>>, %arg4: memref<1x8xf32, #tpu.memory_space<vmem>>, %arg5: memref<2x16x128xbf16, #tpu.memory_space<vmem>>, %arg6: memref<1x8xf32, #tpu.memory_space<vmem>>, %arg7: memref<1x8xf32, #tpu.memory_space<vmem>>, %arg8: memref<1x128xf32, #tpu.memory_space<vmem>>, %arg9: memref<1x128xf32, #tpu.memory_space<vmem>>) attributes {dimension_semantics = [#tpu.dimension_semantics<arbitrary>], iteration_bounds = array<i64: 1>, scalar_prefetch = 0 : i64, scratch_operands = 2 : i64, tpu.core_type = #tpu.core_type<tc>, window_params = [{transform_indices = @transform_0, window_bounds = array<i64: 2, 18, 72>}, {pipeline_mode = #tpu.pipeline_mode<synchronous>, transform_indices = @transform_1, window_bounds = array<i64: 9, 64, 128>}, {pipeline_mode = #tpu.pipeline_mode<synchronous>, transform_indices = @transform_2, window_bounds = array<i64: 1, 8>}, {pipeline_mode = #tpu.pipeline_mode<synchronous>, transform_indices = @transform_3, window_bounds = array<i64: 1, 8>}, {transform_indices = @transform_4, window_bounds = array<i64: 2, 16, 128>}, {pipeline_mode = #tpu.pipeline_mode<synchronous>, transform_indices = @transform_5, window_bounds = array<i64: 1, 8>}, {pipeline_mode = #tpu.pipeline_mode<synchronous>, transform_indices = @transform_6, window_bounds = array<i64: 1, 8>}]} {
    %c0_i32 = arith.constant 0 : i32
    %0 = arith.cmpi eq, %arg0, %c0_i32 : i32
    %1 = arith.extui %0 : i1 to i32
    %c0_i32_0 = arith.constant 0 : i32
    %2 = arith.cmpi ne, %1, %c0_i32_0 : i32
    scf.if %2 {
      %cst_99 = arith.constant 0.000000e+00 : f32
      %132 = vector.broadcast %cst_99 : f32 to vector<1x128xf32>
      %c0_100 = arith.constant 0 : index
      %c0_101 = arith.constant 0 : index
      %133 = vector.load %arg8[%c0_100, %c0_101] : memref<1x128xf32, #tpu.memory_space<vmem>>, vector<1x128xf32>
      tpu.vector_store %arg8[%c0_100, %c0_101], %132 {strides = array<i32>} : memref<1x128xf32, #tpu.memory_space<vmem>>, vector<1x128xf32>,
      %cst_102 = arith.constant 0.000000e+00 : f32
      %134 = vector.broadcast %cst_102 : f32 to vector<1x128xf32>
      %c0_103 = arith.constant 0 : index
      %c0_104 = arith.constant 0 : index
      %135 = vector.load %arg9[%c0_103, %c0_104] : memref<1x128xf32, #tpu.memory_space<vmem>>, vector<1x128xf32>
      tpu.vector_store %arg9[%c0_103, %c0_104], %134 {strides = array<i32>} : memref<1x128xf32, #tpu.memory_space<vmem>>, vector<1x128xf32>,
    } else {
    }
    %cst = arith.constant 0.000000e+00 : f32
    %3 = vector.broadcast %cst : f32 to vector<16x128xf32>
    %c0 = arith.constant 0 : index
    %c0_1 = arith.constant 0 : index
    %c0_2 = arith.constant 0 : index
    %4 = vector.load %arg1[%c0, %c0_1, %c0_2] : memref<2x18x72xbf16, #tpu.memory_space<vmem>>, vector<1x18x72xbf16>
    %5 = vector.shape_cast %4 : vector<1x18x72xbf16> to vector<18x72xbf16>
    %6 = vector.extract_strided_slice %5 {offsets = [0, 0], sizes = [16, 64], strides = [1, 1]} : vector<18x72xbf16> to vector<16x64xbf16>
    %c0_3 = arith.constant 0 : index
    %c0_4 = arith.constant 0 : index
    %c0_5 = arith.constant 0 : index
    %7 = vector.load %arg2[%c0_3, %c0_4, %c0_5] : memref<9x64x128xbf16, #tpu.memory_space<vmem>>, vector<1x64x128xbf16>
    %8 = vector.shape_cast %7 : vector<1x64x128xbf16> to vector<64x128xbf16>
    %cst_6 = arith.constant dense<0.000000e+00> : vector<16x128xf32>
    %9 = tpu.matmul %6, %8, %cst_6 {dimension_numbers = #tpu.dot_dimension_numbers<[1], [0], [0], [1], [0, 0, 1, 1], [], []>} : vector<16x64xbf16>, vector<64x128xbf16>, vector<16x128xf32> -> vector<16x128xf32>
    %10 = arith.addf %3, %9 : vector<16x128xf32>
    %11 = vector.extract_strided_slice %5 {offsets = [0, 4], sizes = [16, 64], strides = [1, 1]} : vector<18x72xbf16> to vector<16x64xbf16>
    %c1 = arith.constant 1 : index
    %c0_7 = arith.constant 0 : index
    %c0_8 = arith.constant 0 : index
    %12 = vector.load %arg2[%c1, %c0_7, %c0_8] : memref<9x64x128xbf16, #tpu.memory_space<vmem>>, vector<1x64x128xbf16>
    %13 = vector.shape_cast %12 : vector<1x64x128xbf16> to vector<64x128xbf16>
    %cst_9 = arith.constant dense<0.000000e+00> : vector<16x128xf32>
    %14 = tpu.matmul %11, %13, %cst_9 {dimension_numbers = #tpu.dot_dimension_numbers<[1], [0], [0], [1], [0, 0, 1, 1], [], []>} : vector<16x64xbf16>, vector<64x128xbf16>, vector<16x128xf32> -> vector<16x128xf32>
    %15 = arith.addf %10, %14 : vector<16x128xf32>
    %16 = vector.extract_strided_slice %5 {offsets = [0, 8], sizes = [16, 64], strides = [1, 1]} : vector<18x72xbf16> to vector<16x64xbf16>
    %c2 = arith.constant 2 : index
    %c0_10 = arith.constant 0 : index
    %c0_11 = arith.constant 0 : index
    %17 = vector.load %arg2[%c2, %c0_10, %c0_11] : memref<9x64x128xbf16, #tpu.memory_space<vmem>>, vector<1x64x128xbf16>
    %18 = vector.shape_cast %17 : vector<1x64x128xbf16> to vector<64x128xbf16>
    %cst_12 = arith.constant dense<0.000000e+00> : vector<16x128xf32>
    %19 = tpu.matmul %16, %18, %cst_12 {dimension_numbers = #tpu.dot_dimension_numbers<[1], [0], [0], [1], [0, 0, 1, 1], [], []>} : vector<16x64xbf16>, vector<64x128xbf16>, vector<16x128xf32> -> vector<16x128xf32>
    %20 = arith.addf %15, %19 : vector<16x128xf32>
    %21 = vector.extract_strided_slice %5 {offsets = [1, 0], sizes = [16, 64], strides = [1, 1]} : vector<18x72xbf16> to vector<16x64xbf16>
    %c3 = arith.constant 3 : index
    %c0_13 = arith.constant 0 : index
    %c0_14 = arith.constant 0 : index
    %22 = vector.load %arg2[%c3, %c0_13, %c0_14] : memref<9x64x128xbf16, #tpu.memory_space<vmem>>, vector<1x64x128xbf16>
    %23 = vector.shape_cast %22 : vector<1x64x128xbf16> to vector<64x128xbf16>
    %cst_15 = arith.constant dense<0.000000e+00> : vector<16x128xf32>
    %24 = tpu.matmul %21, %23, %cst_15 {dimension_numbers = #tpu.dot_dimension_numbers<[1], [0], [0], [1], [0, 0, 1, 1], [], []>} : vector<16x64xbf16>, vector<64x128xbf16>, vector<16x128xf32> -> vector<16x128xf32>
    %25 = arith.addf %20, %24 : vector<16x128xf32>
    %26 = vector.extract_strided_slice %5 {offsets = [1, 4], sizes = [16, 64], strides = [1, 1]} : vector<18x72xbf16> to vector<16x64xbf16>
    %c4 = arith.constant 4 : index
    %c0_16 = arith.constant 0 : index
    %c0_17 = arith.constant 0 : index
    %27 = vector.load %arg2[%c4, %c0_16, %c0_17] : memref<9x64x128xbf16, #tpu.memory_space<vmem>>, vector<1x64x128xbf16>
    %28 = vector.shape_cast %27 : vector<1x64x128xbf16> to vector<64x128xbf16>
    %cst_18 = arith.constant dense<0.000000e+00> : vector<16x128xf32>
    %29 = tpu.matmul %26, %28, %cst_18 {dimension_numbers = #tpu.dot_dimension_numbers<[1], [0], [0], [1], [0, 0, 1, 1], [], []>} : vector<16x64xbf16>, vector<64x128xbf16>, vector<16x128xf32> -> vector<16x128xf32>
    %30 = arith.addf %25, %29 : vector<16x128xf32>
    %31 = vector.extract_strided_slice %5 {offsets = [1, 8], sizes = [16, 64], strides = [1, 1]} : vector<18x72xbf16> to vector<16x64xbf16>
    %c5 = arith.constant 5 : index
    %c0_19 = arith.constant 0 : index
    %c0_20 = arith.constant 0 : index
    %32 = vector.load %arg2[%c5, %c0_19, %c0_20] : memref<9x64x128xbf16, #tpu.memory_space<vmem>>, vector<1x64x128xbf16>
    %33 = vector.shape_cast %32 : vector<1x64x128xbf16> to vector<64x128xbf16>
    %cst_21 = arith.constant dense<0.000000e+00> : vector<16x128xf32>
    %34 = tpu.matmul %31, %33, %cst_21 {dimension_numbers = #tpu.dot_dimension_numbers<[1], [0], [0], [1], [0, 0, 1, 1], [], []>} : vector<16x64xbf16>, vector<64x128xbf16>, vector<16x128xf32> -> vector<16x128xf32>
    %35 = arith.addf %30, %34 : vector<16x128xf32>
    %36 = vector.extract_strided_slice %5 {offsets = [2, 0], sizes = [16, 64], strides = [1, 1]} : vector<18x72xbf16> to vector<16x64xbf16>
    %c6 = arith.constant 6 : index
    %c0_22 = arith.constant 0 : index
    %c0_23 = arith.constant 0 : index
    %37 = vector.load %arg2[%c6, %c0_22, %c0_23] : memref<9x64x128xbf16, #tpu.memory_space<vmem>>, vector<1x64x128xbf16>
    %38 = vector.shape_cast %37 : vector<1x64x128xbf16> to vector<64x128xbf16>
    %cst_24 = arith.constant dense<0.000000e+00> : vector<16x128xf32>
    %39 = tpu.matmul %36, %38, %cst_24 {dimension_numbers = #tpu.dot_dimension_numbers<[1], [0], [0], [1], [0, 0, 1, 1], [], []>} : vector<16x64xbf16>, vector<64x128xbf16>, vector<16x128xf32> -> vector<16x128xf32>
    %40 = arith.addf %35, %39 : vector<16x128xf32>
    %41 = vector.extract_strided_slice %5 {offsets = [2, 4], sizes = [16, 64], strides = [1, 1]} : vector<18x72xbf16> to vector<16x64xbf16>
    %c7 = arith.constant 7 : index
    %c0_25 = arith.constant 0 : index
    %c0_26 = arith.constant 0 : index
    %42 = vector.load %arg2[%c7, %c0_25, %c0_26] : memref<9x64x128xbf16, #tpu.memory_space<vmem>>, vector<1x64x128xbf16>
    %43 = vector.shape_cast %42 : vector<1x64x128xbf16> to vector<64x128xbf16>
    %cst_27 = arith.constant dense<0.000000e+00> : vector<16x128xf32>
    %44 = tpu.matmul %41, %43, %cst_27 {dimension_numbers = #tpu.dot_dimension_numbers<[1], [0], [0], [1], [0, 0, 1, 1], [], []>} : vector<16x64xbf16>, vector<64x128xbf16>, vector<16x128xf32> -> vector<16x128xf32>
    %45 = arith.addf %40, %44 : vector<16x128xf32>
    %46 = vector.extract_strided_slice %5 {offsets = [2, 8], sizes = [16, 64], strides = [1, 1]} : vector<18x72xbf16> to vector<16x64xbf16>
    %c8 = arith.constant 8 : index
    %c0_28 = arith.constant 0 : index
    %c0_29 = arith.constant 0 : index
    %47 = vector.load %arg2[%c8, %c0_28, %c0_29] : memref<9x64x128xbf16, #tpu.memory_space<vmem>>, vector<1x64x128xbf16>
    %48 = vector.shape_cast %47 : vector<1x64x128xbf16> to vector<64x128xbf16>
    %cst_30 = arith.constant dense<0.000000e+00> : vector<16x128xf32>
    %49 = tpu.matmul %46, %48, %cst_30 {dimension_numbers = #tpu.dot_dimension_numbers<[1], [0], [0], [1], [0, 0, 1, 1], [], []>} : vector<16x64xbf16>, vector<64x128xbf16>, vector<16x128xf32> -> vector<16x128xf32>
    %50 = arith.addf %45, %49 : vector<16x128xf32>
    %c0_31 = arith.constant 0 : index
    %c0_32 = arith.constant 0 : index
    %51 = vector.load %arg8[%c0_31, %c0_32] : memref<1x128xf32, #tpu.memory_space<vmem>>, vector<1x128xf32>
    %cst_33 = arith.constant dense<0.000000e+00> : vector<128xf32>
    %52 = vector.multi_reduction <add>, %50, %cst_33 [0] : vector<16x128xf32> to vector<128xf32>
    %53 = vector.shape_cast %52 : vector<128xf32> to vector<1x128xf32>
    %54 = arith.addf %51, %53 : vector<1x128xf32>
    %c0_34 = arith.constant 0 : index
    %c0_35 = arith.constant 0 : index
    %55 = vector.load %arg8[%c0_34, %c0_35] : memref<1x128xf32, #tpu.memory_space<vmem>>, vector<1x128xf32>
    tpu.vector_store %arg8[%c0_34, %c0_35], %54 {strides = array<i32>} : memref<1x128xf32, #tpu.memory_space<vmem>>, vector<1x128xf32>,
    %c0_36 = arith.constant 0 : index
    %c0_37 = arith.constant 0 : index
    %56 = vector.load %arg9[%c0_36, %c0_37] : memref<1x128xf32, #tpu.memory_space<vmem>>, vector<1x128xf32>
    %57 = arith.mulf %50, %50 : vector<16x128xf32>
    %cst_38 = arith.constant dense<0.000000e+00> : vector<128xf32>
    %58 = vector.multi_reduction <add>, %57, %cst_38 [0] : vector<16x128xf32> to vector<128xf32>
    %59 = vector.shape_cast %58 : vector<128xf32> to vector<1x128xf32>
    %60 = arith.addf %56, %59 : vector<1x128xf32>
    %c0_39 = arith.constant 0 : index
    %c0_40 = arith.constant 0 : index
    %61 = vector.load %arg9[%c0_39, %c0_40] : memref<1x128xf32, #tpu.memory_space<vmem>>, vector<1x128xf32>
    tpu.vector_store %arg9[%c0_39, %c0_40], %60 {strides = array<i32>} : memref<1x128xf32, #tpu.memory_space<vmem>>, vector<1x128xf32>,
    %62 = arith.truncf %50 : vector<16x128xf32> to vector<16x128xbf16>
    %c0_41 = arith.constant 0 : index
    %c0_42 = arith.constant 0 : index
    %c0_43 = arith.constant 0 : index
    %63 = vector.load %arg5[%c0_41, %c0_42, %c0_43] : memref<2x16x128xbf16, #tpu.memory_space<vmem>>, vector<1x16x128xbf16>
    %64 = vector.shape_cast %63 : vector<1x16x128xbf16> to vector<16x128xbf16>
    %65 = vector.shape_cast %62 : vector<16x128xbf16> to vector<1x16x128xbf16>
    tpu.vector_store %arg5[%c0_41, %c0_42, %c0_43], %65 {strides = array<i32>} : memref<2x16x128xbf16, #tpu.memory_space<vmem>>, vector<1x16x128xbf16>,
    %cst_44 = arith.constant 0.000000e+00 : f32
    %66 = vector.broadcast %cst_44 : f32 to vector<16x128xf32>
    %c1_45 = arith.constant 1 : index
    %c0_46 = arith.constant 0 : index
    %c0_47 = arith.constant 0 : index
    %67 = vector.load %arg1[%c1_45, %c0_46, %c0_47] : memref<2x18x72xbf16, #tpu.memory_space<vmem>>, vector<1x18x72xbf16>
    %68 = vector.shape_cast %67 : vector<1x18x72xbf16> to vector<18x72xbf16>
    %69 = vector.extract_strided_slice %68 {offsets = [0, 0], sizes = [16, 64], strides = [1, 1]} : vector<18x72xbf16> to vector<16x64xbf16>
    %c0_48 = arith.constant 0 : index
    %c0_49 = arith.constant 0 : index
    %c0_50 = arith.constant 0 : index
    %70 = vector.load %arg2[%c0_48, %c0_49, %c0_50] : memref<9x64x128xbf16, #tpu.memory_space<vmem>>, vector<1x64x128xbf16>
    %71 = vector.shape_cast %70 : vector<1x64x128xbf16> to vector<64x128xbf16>
    %cst_51 = arith.constant dense<0.000000e+00> : vector<16x128xf32>
    %72 = tpu.matmul %69, %71, %cst_51 {dimension_numbers = #tpu.dot_dimension_numbers<[1], [0], [0], [1], [0, 0, 1, 1], [], []>} : vector<16x64xbf16>, vector<64x128xbf16>, vector<16x128xf32> -> vector<16x128xf32>
    %73 = arith.addf %66, %72 : vector<16x128xf32>
    %74 = vector.extract_strided_slice %68 {offsets = [0, 4], sizes = [16, 64], strides = [1, 1]} : vector<18x72xbf16> to vector<16x64xbf16>
    %c1_52 = arith.constant 1 : index
    %c0_53 = arith.constant 0 : index
    %c0_54 = arith.constant 0 : index
    %75 = vector.load %arg2[%c1_52, %c0_53, %c0_54] : memref<9x64x128xbf16, #tpu.memory_space<vmem>>, vector<1x64x128xbf16>
    %76 = vector.shape_cast %75 : vector<1x64x128xbf16> to vector<64x128xbf16>
    %cst_55 = arith.constant dense<0.000000e+00> : vector<16x128xf32>
    %77 = tpu.matmul %74, %76, %cst_55 {dimension_numbers = #tpu.dot_dimension_numbers<[1], [0], [0], [1], [0, 0, 1, 1], [], []>} : vector<16x64xbf16>, vector<64x128xbf16>, vector<16x128xf32> -> vector<16x128xf32>
    %78 = arith.addf %73, %77 : vector<16x128xf32>
    %79 = vector.extract_strided_slice %68 {offsets = [0, 8], sizes = [16, 64], strides = [1, 1]} : vector<18x72xbf16> to vector<16x64xbf16>
    %c2_56 = arith.constant 2 : index
    %c0_57 = arith.constant 0 : index
    %c0_58 = arith.constant 0 : index
    %80 = vector.load %arg2[%c2_56, %c0_57, %c0_58] : memref<9x64x128xbf16, #tpu.memory_space<vmem>>, vector<1x64x128xbf16>
    %81 = vector.shape_cast %80 : vector<1x64x128xbf16> to vector<64x128xbf16>
    %cst_59 = arith.constant dense<0.000000e+00> : vector<16x128xf32>
    %82 = tpu.matmul %79, %81, %cst_59 {dimension_numbers = #tpu.dot_dimension_numbers<[1], [0], [0], [1], [0, 0, 1, 1], [], []>} : vector<16x64xbf16>, vector<64x128xbf16>, vector<16x128xf32> -> vector<16x128xf32>
    %83 = arith.addf %78, %82 : vector<16x128xf32>
    %84 = vector.extract_strided_slice %68 {offsets = [1, 0], sizes = [16, 64], strides = [1, 1]} : vector<18x72xbf16> to vector<16x64xbf16>
    %c3_60 = arith.constant 3 : index
    %c0_61 = arith.constant 0 : index
    %c0_62 = arith.constant 0 : index
    %85 = vector.load %arg2[%c3_60, %c0_61, %c0_62] : memref<9x64x128xbf16, #tpu.memory_space<vmem>>, vector<1x64x128xbf16>
    %86 = vector.shape_cast %85 : vector<1x64x128xbf16> to vector<64x128xbf16>
    %cst_63 = arith.constant dense<0.000000e+00> : vector<16x128xf32>
    %87 = tpu.matmul %84, %86, %cst_63 {dimension_numbers = #tpu.dot_dimension_numbers<[1], [0], [0], [1], [0, 0, 1, 1], [], []>} : vector<16x64xbf16>, vector<64x128xbf16>, vector<16x128xf32> -> vector<16x128xf32>
    %88 = arith.addf %83, %87 : vector<16x128xf32>
    %89 = vector.extract_strided_slice %68 {offsets = [1, 4], sizes = [16, 64], strides = [1, 1]} : vector<18x72xbf16> to vector<16x64xbf16>
    %c4_64 = arith.constant 4 : index
    %c0_65 = arith.constant 0 : index
    %c0_66 = arith.constant 0 : index
    %90 = vector.load %arg2[%c4_64, %c0_65, %c0_66] : memref<9x64x128xbf16, #tpu.memory_space<vmem>>, vector<1x64x128xbf16>
    %91 = vector.shape_cast %90 : vector<1x64x128xbf16> to vector<64x128xbf16>
    %cst_67 = arith.constant dense<0.000000e+00> : vector<16x128xf32>
    %92 = tpu.matmul %89, %91, %cst_67 {dimension_numbers = #tpu.dot_dimension_numbers<[1], [0], [0], [1], [0, 0, 1, 1], [], []>} : vector<16x64xbf16>, vector<64x128xbf16>, vector<16x128xf32> -> vector<16x128xf32>
    %93 = arith.addf %88, %92 : vector<16x128xf32>
    %94 = vector.extract_strided_slice %68 {offsets = [1, 8], sizes = [16, 64], strides = [1, 1]} : vector<18x72xbf16> to vector<16x64xbf16>
    %c5_68 = arith.constant 5 : index
    %c0_69 = arith.constant 0 : index
    %c0_70 = arith.constant 0 : index
    %95 = vector.load %arg2[%c5_68, %c0_69, %c0_70] : memref<9x64x128xbf16, #tpu.memory_space<vmem>>, vector<1x64x128xbf16>
    %96 = vector.shape_cast %95 : vector<1x64x128xbf16> to vector<64x128xbf16>
    %cst_71 = arith.constant dense<0.000000e+00> : vector<16x128xf32>
    %97 = tpu.matmul %94, %96, %cst_71 {dimension_numbers = #tpu.dot_dimension_numbers<[1], [0], [0], [1], [0, 0, 1, 1], [], []>} : vector<16x64xbf16>, vector<64x128xbf16>, vector<16x128xf32> -> vector<16x128xf32>
    %98 = arith.addf %93, %97 : vector<16x128xf32>
    %99 = vector.extract_strided_slice %68 {offsets = [2, 0], sizes = [16, 64], strides = [1, 1]} : vector<18x72xbf16> to vector<16x64xbf16>
    %c6_72 = arith.constant 6 : index
    %c0_73 = arith.constant 0 : index
    %c0_74 = arith.constant 0 : index
    %100 = vector.load %arg2[%c6_72, %c0_73, %c0_74] : memref<9x64x128xbf16, #tpu.memory_space<vmem>>, vector<1x64x128xbf16>
    %101 = vector.shape_cast %100 : vector<1x64x128xbf16> to vector<64x128xbf16>
    %cst_75 = arith.constant dense<0.000000e+00> : vector<16x128xf32>
    %102 = tpu.matmul %99, %101, %cst_75 {dimension_numbers = #tpu.dot_dimension_numbers<[1], [0], [0], [1], [0, 0, 1, 1], [], []>} : vector<16x64xbf16>, vector<64x128xbf16>, vector<16x128xf32> -> vector<16x128xf32>
    %103 = arith.addf %98, %102 : vector<16x128xf32>
    %104 = vector.extract_strided_slice %68 {offsets = [2, 4], sizes = [16, 64], strides = [1, 1]} : vector<18x72xbf16> to vector<16x64xbf16>
    %c7_76 = arith.constant 7 : index
    %c0_77 = arith.constant 0 : index
    %c0_78 = arith.constant 0 : index
    %105 = vector.load %arg2[%c7_76, %c0_77, %c0_78] : memref<9x64x128xbf16, #tpu.memory_space<vmem>>, vector<1x64x128xbf16>
    %106 = vector.shape_cast %105 : vector<1x64x128xbf16> to vector<64x128xbf16>
    %cst_79 = arith.constant dense<0.000000e+00> : vector<16x128xf32>
    %107 = tpu.matmul %104, %106, %cst_79 {dimension_numbers = #tpu.dot_dimension_numbers<[1], [0], [0], [1], [0, 0, 1, 1], [], []>} : vector<16x64xbf16>, vector<64x128xbf16>, vector<16x128xf32> -> vector<16x128xf32>
    %108 = arith.addf %103, %107 : vector<16x128xf32>
    %109 = vector.extract_strided_slice %68 {offsets = [2, 8], sizes = [16, 64], strides = [1, 1]} : vector<18x72xbf16> to vector<16x64xbf16>
    %c8_80 = arith.constant 8 : index
    %c0_81 = arith.constant 0 : index
    %c0_82 = arith.constant 0 : index
    %110 = vector.load %arg2[%c8_80, %c0_81, %c0_82] : memref<9x64x128xbf16, #tpu.memory_space<vmem>>, vector<1x64x128xbf16>
    %111 = vector.shape_cast %110 : vector<1x64x128xbf16> to vector<64x128xbf16>
    %cst_83 = arith.constant dense<0.000000e+00> : vector<16x128xf32>
    %112 = tpu.matmul %109, %111, %cst_83 {dimension_numbers = #tpu.dot_dimension_numbers<[1], [0], [0], [1], [0, 0, 1, 1], [], []>} : vector<16x64xbf16>, vector<64x128xbf16>, vector<16x128xf32> -> vector<16x128xf32>
    %113 = arith.addf %108, %112 : vector<16x128xf32>
    %c0_84 = arith.constant 0 : index
    %c0_85 = arith.constant 0 : index
    %114 = vector.load %arg8[%c0_84, %c0_85] : memref<1x128xf32, #tpu.memory_space<vmem>>, vector<1x128xf32>
    %cst_86 = arith.constant dense<0.000000e+00> : vector<128xf32>
    %115 = vector.multi_reduction <add>, %113, %cst_86 [0] : vector<16x128xf32> to vector<128xf32>
    %116 = vector.shape_cast %115 : vector<128xf32> to vector<1x128xf32>
    %117 = arith.addf %114, %116 : vector<1x128xf32>
    %c0_87 = arith.constant 0 : index
    %c0_88 = arith.constant 0 : index
    %118 = vector.load %arg8[%c0_87, %c0_88] : memref<1x128xf32, #tpu.memory_space<vmem>>, vector<1x128xf32>
    tpu.vector_store %arg8[%c0_87, %c0_88], %117 {strides = array<i32>} : memref<1x128xf32, #tpu.memory_space<vmem>>, vector<1x128xf32>,
    %c0_89 = arith.constant 0 : index
    %c0_90 = arith.constant 0 : index
    %119 = vector.load %arg9[%c0_89, %c0_90] : memref<1x128xf32, #tpu.memory_space<vmem>>, vector<1x128xf32>
    %120 = arith.mulf %113, %113 : vector<16x128xf32>
    %cst_91 = arith.constant dense<0.000000e+00> : vector<128xf32>
    %121 = vector.multi_reduction <add>, %120, %cst_91 [0] : vector<16x128xf32> to vector<128xf32>
    %122 = vector.shape_cast %121 : vector<128xf32> to vector<1x128xf32>
    %123 = arith.addf %119, %122 : vector<1x128xf32>
    %c0_92 = arith.constant 0 : index
    %c0_93 = arith.constant 0 : index
    %124 = vector.load %arg9[%c0_92, %c0_93] : memref<1x128xf32, #tpu.memory_space<vmem>>, vector<1x128xf32>
    tpu.vector_store %arg9[%c0_92, %c0_93], %123 {strides = array<i32>} : memref<1x128xf32, #tpu.memory_space<vmem>>, vector<1x128xf32>,
    %125 = arith.truncf %113 : vector<16x128xf32> to vector<16x128xbf16>
    %c1_94 = arith.constant 1 : index
    %c0_95 = arith.constant 0 : index
    %c0_96 = arith.constant 0 : index
    %126 = vector.load %arg5[%c1_94, %c0_95, %c0_96] : memref<2x16x128xbf16, #tpu.memory_space<vmem>>, vector<1x16x128xbf16>
    %127 = vector.shape_cast %126 : vector<1x16x128xbf16> to vector<16x128xbf16>
    %128 = vector.shape_cast %125 : vector<16x128xbf16> to vector<1x16x128xbf16>
    tpu.vector_store %arg5[%c1_94, %c0_95, %c0_96], %128 {strides = array<i32>} : memref<2x16x128xbf16, #tpu.memory_space<vmem>>, vector<1x16x128xbf16>,
    %c0_i32_97 = arith.constant 0 : i32
    %129 = arith.cmpi eq, %arg0, %c0_i32_97 : i32
    %130 = arith.extui %129 : i1 to i32
    %c0_i32_98 = arith.constant 0 : i32
    %131 = arith.cmpi ne, %130, %c0_i32_98 : i32
    scf.if %131 {
      %c0_99 = arith.constant 0 : index
      %c0_100 = arith.constant 0 : index
      %132 = vector.load %arg8[%c0_99, %c0_100] : memref<1x128xf32, #tpu.memory_space<vmem>>, vector<1x128xf32>
      %c0_101 = arith.constant 0 : index
      %c0_102 = arith.constant 0 : index
      %133 = vector.load %arg9[%c0_101, %c0_102] : memref<1x128xf32, #tpu.memory_space<vmem>>, vector<1x128xf32>
      %cst_103 = arith.constant 0.000000e+00 : f32
      %134 = vector.broadcast %cst_103 : f32 to vector<1x8xf32>
      %cst_104 = arith.constant 0.000000e+00 : f32
      %135 = vector.broadcast %cst_104 : f32 to vector<1x8xf32>
      %136 = vector.extract_strided_slice %132 {offsets = [0, 0], sizes = [1, 8], strides = [1, 1]} : vector<1x128xf32> to vector<1x8xf32>
      %137 = arith.addf %134, %136 : vector<1x8xf32>
      %138 = vector.extract_strided_slice %133 {offsets = [0, 0], sizes = [1, 8], strides = [1, 1]} : vector<1x128xf32> to vector<1x8xf32>
      %139 = arith.addf %135, %138 : vector<1x8xf32>
      %140 = vector.extract_strided_slice %132 {offsets = [0, 8], sizes = [1, 8], strides = [1, 1]} : vector<1x128xf32> to vector<1x8xf32>
      %141 = arith.addf %137, %140 : vector<1x8xf32>
      %142 = vector.extract_strided_slice %133 {offsets = [0, 8], sizes = [1, 8], strides = [1, 1]} : vector<1x128xf32> to vector<1x8xf32>
      %143 = arith.addf %139, %142 : vector<1x8xf32>
      %144 = vector.extract_strided_slice %132 {offsets = [0, 16], sizes = [1, 8], strides = [1, 1]} : vector<1x128xf32> to vector<1x8xf32>
      %145 = arith.addf %141, %144 : vector<1x8xf32>
      %146 = vector.extract_strided_slice %133 {offsets = [0, 16], sizes = [1, 8], strides = [1, 1]} : vector<1x128xf32> to vector<1x8xf32>
      %147 = arith.addf %143, %146 : vector<1x8xf32>
      %148 = vector.extract_strided_slice %132 {offsets = [0, 24], sizes = [1, 8], strides = [1, 1]} : vector<1x128xf32> to vector<1x8xf32>
      %149 = arith.addf %145, %148 : vector<1x8xf32>
      %150 = vector.extract_strided_slice %133 {offsets = [0, 24], sizes = [1, 8], strides = [1, 1]} : vector<1x128xf32> to vector<1x8xf32>
      %151 = arith.addf %147, %150 : vector<1x8xf32>
      %152 = vector.extract_strided_slice %132 {offsets = [0, 32], sizes = [1, 8], strides = [1, 1]} : vector<1x128xf32> to vector<1x8xf32>
      %153 = arith.addf %149, %152 : vector<1x8xf32>
      %154 = vector.extract_strided_slice %133 {offsets = [0, 32], sizes = [1, 8], strides = [1, 1]} : vector<1x128xf32> to vector<1x8xf32>
      %155 = arith.addf %151, %154 : vector<1x8xf32>
      %156 = vector.extract_strided_slice %132 {offsets = [0, 40], sizes = [1, 8], strides = [1, 1]} : vector<1x128xf32> to vector<1x8xf32>
      %157 = arith.addf %153, %156 : vector<1x8xf32>
      %158 = vector.extract_strided_slice %133 {offsets = [0, 40], sizes = [1, 8], strides = [1, 1]} : vector<1x128xf32> to vector<1x8xf32>
      %159 = arith.addf %155, %158 : vector<1x8xf32>
      %160 = vector.extract_strided_slice %132 {offsets = [0, 48], sizes = [1, 8], strides = [1, 1]} : vector<1x128xf32> to vector<1x8xf32>
      %161 = arith.addf %157, %160 : vector<1x8xf32>
      %162 = vector.extract_strided_slice %133 {offsets = [0, 48], sizes = [1, 8], strides = [1, 1]} : vector<1x128xf32> to vector<1x8xf32>
      %163 = arith.addf %159, %162 : vector<1x8xf32>
      %164 = vector.extract_strided_slice %132 {offsets = [0, 56], sizes = [1, 8], strides = [1, 1]} : vector<1x128xf32> to vector<1x8xf32>
      %165 = arith.addf %161, %164 : vector<1x8xf32>
      %166 = vector.extract_strided_slice %133 {offsets = [0, 56], sizes = [1, 8], strides = [1, 1]} : vector<1x128xf32> to vector<1x8xf32>
      %167 = arith.addf %163, %166 : vector<1x8xf32>
      %168 = vector.extract_strided_slice %132 {offsets = [0, 64], sizes = [1, 8], strides = [1, 1]} : vector<1x128xf32> to vector<1x8xf32>
      %169 = arith.addf %165, %168 : vector<1x8xf32>
      %170 = vector.extract_strided_slice %133 {offsets = [0, 64], sizes = [1, 8], strides = [1, 1]} : vector<1x128xf32> to vector<1x8xf32>
      %171 = arith.addf %167, %170 : vector<1x8xf32>
      %172 = vector.extract_strided_slice %132 {offsets = [0, 72], sizes = [1, 8], strides = [1, 1]} : vector<1x128xf32> to vector<1x8xf32>
      %173 = arith.addf %169, %172 : vector<1x8xf32>
      %174 = vector.extract_strided_slice %133 {offsets = [0, 72], sizes = [1, 8], strides = [1, 1]} : vector<1x128xf32> to vector<1x8xf32>
      %175 = arith.addf %171, %174 : vector<1x8xf32>
      %176 = vector.extract_strided_slice %132 {offsets = [0, 80], sizes = [1, 8], strides = [1, 1]} : vector<1x128xf32> to vector<1x8xf32>
      %177 = arith.addf %173, %176 : vector<1x8xf32>
      %178 = vector.extract_strided_slice %133 {offsets = [0, 80], sizes = [1, 8], strides = [1, 1]} : vector<1x128xf32> to vector<1x8xf32>
      %179 = arith.addf %175, %178 : vector<1x8xf32>
      %180 = vector.extract_strided_slice %132 {offsets = [0, 88], sizes = [1, 8], strides = [1, 1]} : vector<1x128xf32> to vector<1x8xf32>
      %181 = arith.addf %177, %180 : vector<1x8xf32>
      %182 = vector.extract_strided_slice %133 {offsets = [0, 88], sizes = [1, 8], strides = [1, 1]} : vector<1x128xf32> to vector<1x8xf32>
      %183 = arith.addf %179, %182 : vector<1x8xf32>
      %184 = vector.extract_strided_slice %132 {offsets = [0, 96], sizes = [1, 8], strides = [1, 1]} : vector<1x128xf32> to vector<1x8xf32>
      %185 = arith.addf %181, %184 : vector<1x8xf32>
      %186 = vector.extract_strided_slice %133 {offsets = [0, 96], sizes = [1, 8], strides = [1, 1]} : vector<1x128xf32> to vector<1x8xf32>
      %187 = arith.addf %183, %186 : vector<1x8xf32>
      %188 = vector.extract_strided_slice %132 {offsets = [0, 104], sizes = [1, 8], strides = [1, 1]} : vector<1x128xf32> to vector<1x8xf32>
      %189 = arith.addf %185, %188 : vector<1x8xf32>
      %190 = vector.extract_strided_slice %133 {offsets = [0, 104], sizes = [1, 8], strides = [1, 1]} : vector<1x128xf32> to vector<1x8xf32>
      %191 = arith.addf %187, %190 : vector<1x8xf32>
      %192 = vector.extract_strided_slice %132 {offsets = [0, 112], sizes = [1, 8], strides = [1, 1]} : vector<1x128xf32> to vector<1x8xf32>
      %193 = arith.addf %189, %192 : vector<1x8xf32>
      %194 = vector.extract_strided_slice %133 {offsets = [0, 112], sizes = [1, 8], strides = [1, 1]} : vector<1x128xf32> to vector<1x8xf32>
      %195 = arith.addf %191, %194 : vector<1x8xf32>
      %196 = vector.extract_strided_slice %132 {offsets = [0, 120], sizes = [1, 8], strides = [1, 1]} : vector<1x128xf32> to vector<1x8xf32>
      %197 = arith.addf %193, %196 : vector<1x8xf32>
      %198 = vector.extract_strided_slice %133 {offsets = [0, 120], sizes = [1, 8], strides = [1, 1]} : vector<1x128xf32> to vector<1x8xf32>
      %199 = arith.addf %195, %198 : vector<1x8xf32>
      %cst_105 = arith.constant 0.001953125 : f32
      %200 = vector.broadcast %cst_105 : f32 to vector<1x8xf32>
      %201 = arith.mulf %197, %200 : vector<1x8xf32>
      %cst_106 = arith.constant 0.001953125 : f32
      %202 = vector.broadcast %cst_106 : f32 to vector<1x8xf32>
      %203 = arith.mulf %199, %202 : vector<1x8xf32>
      %204 = arith.mulf %201, %201 : vector<1x8xf32>
      %205 = arith.subf %203, %204 : vector<1x8xf32>
      %cst_107 = arith.constant 0.000000e+00 : f32
      %206 = vector.broadcast %cst_107 : f32 to vector<1x8xf32>
      %207 = arith.maximumf %205, %206 : vector<1x8xf32>
      %c0_108 = arith.constant 0 : index
      %c0_109 = arith.constant 0 : index
      %208 = vector.load %arg3[%c0_108, %c0_109] : memref<1x8xf32, #tpu.memory_space<vmem>>, vector<1x8xf32>
      %cst_110 = arith.constant 9.99999974E-6 : f32
      %209 = vector.broadcast %cst_110 : f32 to vector<1x8xf32>
      %210 = arith.addf %207, %209 : vector<1x8xf32>
      %211 = math.rsqrt %210 : vector<1x8xf32>
      %212 = arith.mulf %208, %211 : vector<1x8xf32>
      %c0_111 = arith.constant 0 : index
      %c0_112 = arith.constant 0 : index
      %213 = vector.load %arg6[%c0_111, %c0_112] : memref<1x8xf32, #tpu.memory_space<vmem>>, vector<1x8xf32>
      tpu.vector_store %arg6[%c0_111, %c0_112], %212 {strides = array<i32>} : memref<1x8xf32, #tpu.memory_space<vmem>>, vector<1x8xf32>,
      %c0_113 = arith.constant 0 : index
      %c0_114 = arith.constant 0 : index
      %214 = vector.load %arg4[%c0_113, %c0_114] : memref<1x8xf32, #tpu.memory_space<vmem>>, vector<1x8xf32>
      %215 = arith.mulf %201, %212 : vector<1x8xf32>
      %216 = arith.subf %214, %215 : vector<1x8xf32>
      %c0_115 = arith.constant 0 : index
      %c0_116 = arith.constant 0 : index
      %217 = vector.load %arg7[%c0_115, %c0_116] : memref<1x8xf32, #tpu.memory_space<vmem>>, vector<1x8xf32>
      tpu.vector_store %arg7[%c0_115, %c0_116], %216 {strides = array<i32>} : memref<1x8xf32, #tpu.memory_space<vmem>>, vector<1x8xf32>,
    } else {
    }
    return
  }
  func.func @transform_0(%arg0: i32) -> (i32, i32, i32) {
    %c0_i32 = arith.constant 0 : i32
    %c0_i32_0 = arith.constant 0 : i32
    %c0_i32_1 = arith.constant 0 : i32
    return %arg0, %c0_i32, %c0_i32_0 : i32, i32, i32
  }
  func.func @transform_1(%arg0: i32) -> (i32, i32, i32) {
    %c0_i32 = arith.constant 0 : i32
    %c0_i32_0 = arith.constant 0 : i32
    %c0_i32_1 = arith.constant 0 : i32
    %c0_i32_2 = arith.constant 0 : i32
    return %c0_i32, %c0_i32_0, %c0_i32_1 : i32, i32, i32
  }
  func.func @transform_2(%arg0: i32) -> (i32, i32) {
    %c0_i32 = arith.constant 0 : i32
    %c0_i32_0 = arith.constant 0 : i32
    %c0_i32_1 = arith.constant 0 : i32
    return %c0_i32, %c0_i32_0 : i32, i32
  }
  func.func @transform_3(%arg0: i32) -> (i32, i32) {
    %c0_i32 = arith.constant 0 : i32
    %c0_i32_0 = arith.constant 0 : i32
    %c0_i32_1 = arith.constant 0 : i32
    return %c0_i32, %c0_i32_0 : i32, i32
  }
  func.func @transform_4(%arg0: i32) -> (i32, i32, i32) {
    %c0_i32 = arith.constant 0 : i32
    %c0_i32_0 = arith.constant 0 : i32
    %c0_i32_1 = arith.constant 0 : i32
    return %arg0, %c0_i32, %c0_i32_0 : i32, i32, i32
  }
  func.func @transform_5(%arg0: i32) -> (i32, i32) {
    %c0_i32 = arith.constant 0 : i32
    %c0_i32_0 = arith.constant 0 : i32
    %c0_i32_1 = arith.constant 0 : i32
    return %c0_i32, %c0_i32_0 : i32, i32
  }
  func.func @transform_6(%arg0: i32) -> (i32, i32) {
    %c0_i32 = arith.constant 0 : i32
    %c0_i32_0 = arith.constant 0 : i32
    %c0_i32_1 = arith.constant 0 : i32
    return %c0_i32, %c0_i32_0 : i32, i32
  }
}

module attributes {stable_mosaic.version = 11 : i64} {
  func.func @_bn_act_kernel(%arg0: i32, %arg1: memref<32x128xbf16, #tpu.memory_space<vmem>>, %arg2: memref<1x128xf32, #tpu.memory_space<vmem>>, %arg3: memref<1x128xf32, #tpu.memory_space<vmem>>, %arg4: memref<32x128xf32, #tpu.memory_space<vmem>>) attributes {dimension_semantics = [#tpu.dimension_semantics<parallel>], iteration_bounds = array<i64: 1>, scalar_prefetch = 0 : i64, scratch_operands = 0 : i64, tpu.core_type = #tpu.core_type<tc>, window_params = [{transform_indices = @transform_0, window_bounds = array<i64: 32, 128>}, {pipeline_mode = #tpu.pipeline_mode<synchronous>, transform_indices = @transform_1, window_bounds = array<i64: 1, 128>}, {pipeline_mode = #tpu.pipeline_mode<synchronous>, transform_indices = @transform_2, window_bounds = array<i64: 1, 128>}, {transform_indices = @transform_3, window_bounds = array<i64: 32, 128>}]} {
    %c0 = arith.constant 0 : index
    %c0_0 = arith.constant 0 : index
    %0 = vector.load %arg1[%c0, %c0_0] : memref<32x128xbf16, #tpu.memory_space<vmem>>, vector<32x128xbf16>
    %1 = arith.extf %0 : vector<32x128xbf16> to vector<32x128xf32>
    %c0_1 = arith.constant 0 : index
    %c0_2 = arith.constant 0 : index
    %2 = vector.load %arg2[%c0_1, %c0_2] : memref<1x128xf32, #tpu.memory_space<vmem>>, vector<1x128xf32>
    %3 = vector.broadcast %2 : vector<1x128xf32> to vector<32x128xf32>
    %4 = arith.mulf %1, %3 : vector<32x128xf32>
    %c0_3 = arith.constant 0 : index
    %c0_4 = arith.constant 0 : index
    %5 = vector.load %arg3[%c0_3, %c0_4] : memref<1x128xf32, #tpu.memory_space<vmem>>, vector<1x128xf32>
    %6 = vector.broadcast %5 : vector<1x128xf32> to vector<32x128xf32>
    %7 = arith.addf %4, %6 : vector<32x128xf32>
    %cst = arith.constant 0.000000e+00 : f32
    %8 = vector.broadcast %cst : f32 to vector<32x128xf32>
    %9 = arith.cmpf ogt, %7, %8 : vector<32x128xf32>
    %cst_5 = arith.constant 1.000000e-01 : f32
    %10 = vector.broadcast %cst_5 : f32 to vector<32x128xf32>
    %11 = arith.mulf %10, %7 : vector<32x128xf32>
    %12 = arith.select %9, %7, %11 : vector<32x128xi1>, vector<32x128xf32>
    %c0_6 = arith.constant 0 : index
    %c0_7 = arith.constant 0 : index
    %13 = vector.load %arg4[%c0_6, %c0_7] : memref<32x128xf32, #tpu.memory_space<vmem>>, vector<32x128xf32>
    tpu.vector_store %arg4[%c0_6, %c0_7], %12 {strides = array<i32>} : memref<32x128xf32, #tpu.memory_space<vmem>>, vector<32x128xf32>,
    return
  }
  func.func @transform_0(%arg0: i32) -> (i32, i32) {
    %c0_i32 = arith.constant 0 : i32
    %c0_i32_0 = arith.constant 0 : i32
    return %arg0, %c0_i32 : i32, i32
  }
  func.func @transform_1(%arg0: i32) -> (i32, i32) {
    %c0_i32 = arith.constant 0 : i32
    %c0_i32_0 = arith.constant 0 : i32
    %c0_i32_1 = arith.constant 0 : i32
    return %c0_i32, %c0_i32_0 : i32, i32
  }
  func.func @transform_2(%arg0: i32) -> (i32, i32) {
    %c0_i32 = arith.constant 0 : i32
    %c0_i32_0 = arith.constant 0 : i32
    %c0_i32_1 = arith.constant 0 : i32
    return %c0_i32, %c0_i32_0 : i32, i32
  }
  func.func @transform_3(%arg0: i32) -> (i32, i32) {
    %c0_i32 = arith.constant 0 : i32
    %c0_i32_0 = arith.constant 0 : i32
    return %arg0, %c0_i32 : i32, i32
  }
}

</mosaic_0001>

<llo_original>
// kernel: basic_block_forward.3
$region0: #{basic_block_forward.3}
  #allocation0 [shape = 'u32[]', space=smem, size = 0x4, offset = 0x4, fixed_abs, tag = 'smem constant byte address 0x4 - core index']
  #allocation1 [shape = 'u32[144,128]{1,0:T(1,128)}', space=vmem, size = 0x12000, scoped, tag = 'internal scratch']
  %s0 = inlined_call_operand.vmem [shape: bf16[32,128], index: 0, kind: input, shape index: {}]
  %s1 = inlined_call_operand.vmem [shape: f32[1,128], index: 1, kind: input, shape index: {}]
  %s2 = inlined_call_operand.vmem [shape: f32[1,128], index: 2, kind: input, shape index: {}]
  %s3 = inlined_call_operand.vmem [shape: f32[32,128], index: 3, kind: output, shape index: {}]
  %s4 = sld [smem:[#allocation0]]
  $region22: #{basic_block_forward.3} parent=0
    _
  %s6 = ssub.s32 1, %s4
  %s7 = scalar_select 0, %s6, %s4
  // Predicated region
  $region2: #{basic_block_forward.3} parent=0 // pred_check
    _
  $region3: #{basic_block_forward.3} parent=0 // pred_check_branch
    %9 = sbr.rel (0) target = $region5
  $region4: #{basic_block_forward.3} parent=0 // pred_region
    _
  $region5: #{basic_block_forward.3} parent=0 // pred_fallthru
    _
  // Predicated region
  $region6: #{basic_block_forward.3} parent=0 // pred_check
    _
  $region7: #{basic_block_forward.3} parent=0 // pred_check_branch
    %11 = sbr.rel (0) target = $region9
  $region8: #{basic_block_forward.3} parent=0 // pred_region
    _
  $region9: #{basic_block_forward.3} parent=0 // pred_fallthru
    _
  // Predicated region
  $region10: #{basic_block_forward.3} parent=0 // pred_check
    _
  $region11: #{basic_block_forward.3} parent=0 // pred_check_branch
    %13 = sbr.rel (0) target = $region13
  $region12: #{basic_block_forward.3} parent=0 // pred_region
    _
  $region13: #{basic_block_forward.3} parent=0 // pred_fallthru
    _
  %v14 = vld [vmem:[%s0] sm:$0xf]
  %v15 = vld [vmem:[%s0 + $0x4] sm:$0xf]
  %v16 = vld [vmem:[%s0 + $0x8] sm:$0xf]
  %v17 = vld [vmem:[%s0 + $0xc] sm:$0xf]
  %v18 = vunpack.c.l.bf16 %v14
  %v19 = vunpack.c.l.bf16 %v15
  %v20 = vunpack.c.l.bf16 %v16
  %v21 = vunpack.c.l.bf16 %v17
  %v22 = vld [vmem:[%s1] sm:$0x1]
  %v24 = vlaneseq
  %v25 = vshrl.u32 %v24, 7
  %v26 = vsub.s32 0, %v25
  %v27 = vrot.slane %v22, %v26
  %v29 = vmul.f32 %v18, %v27
  %v30 = vmul.f32 %v19, %v27
  %v31 = vmul.f32 %v20, %v27
  %v32 = vmul.f32 %v21, %v27
  %v33 = vld [vmem:[%s2] sm:$0x1]
  %v35 = vlaneseq
  %v36 = vshrl.u32 %v35, 7
  %v37 = vsub.s32 0, %v36
  %v38 = vrot.slane %v33, %v37
  %v40 = vadd.f32 %v29, %v38
  %v41 = vadd.f32 %v30, %v38
  %v42 = vadd.f32 %v31, %v38
  %v43 = vadd.f32 %v32, %v38
  %vm44 = vcmp.gt.f32.partialorder %v40, 0.0
  %vm45 = vcmp.gt.f32.partialorder %v41, 0.0
  %vm46 = vcmp.gt.f32.partialorder %v42, 0.0
  %vm47 = vcmp.gt.f32.partialorder %v43, 0.0
  %v48 = vmul.f32 %v40, 0.1
  %v49 = vmul.f32 %v41, 0.1
  %v50 = vmul.f32 %v42, 0.1
  %v51 = vmul.f32 %v43, 0.1
  %v52 = vsel %vm44, %v40, %v48
  %v53 = vsel %vm45, %v41, %v49
  %v54 = vsel %vm46, %v42, %v50
  %v55 = vsel %vm47, %v43, %v51
  %56 = vst [vmem:[%s3] sm:$0xff] %v52
  %57 = vst [vmem:[%s3 + $0x8] sm:$0xff] %v53
  %58 = vst [vmem:[%s3 + $0x10] sm:$0xff] %v54
  %59 = vst [vmem:[%s3 + $0x18] sm:$0xff] %v55
  // Predicated region
  $region14: #{basic_block_forward.3} parent=0 // pred_check
    _
  $region15: #{basic_block_forward.3} parent=0 // pred_check_branch
    %61 = sbr.rel (0) target = $region17
  $region16: #{basic_block_forward.3} parent=0 // pred_region
    _
  $region17: #{basic_block_forward.3} parent=0 // pred_fallthru
    _
  // Predicated region
  $region18: #{basic_block_forward.3} parent=0 // pred_check
    _
  $region19: #{basic_block_forward.3} parent=0 // pred_check_branch
    %63 = sbr.rel (0) target = $region21
  $region20: #{basic_block_forward.3} parent=0 // pred_region
    _
  $region21: #{basic_block_forward.3} parent=0 // pred_fallthru
    _

// kernel: basic_block_forward.2
$region0: #{basic_block_forward.2}
  #allocation0 [shape = 'u32[]', space=smem, size = 0x4, offset = 0x4, fixed_abs, tag = 'smem constant byte address 0x4 - core index']
  #allocation1 [shape = 'u32[144,128]{1,0:T(1,128)}', space=vmem, size = 0x12000, scoped, tag = 'internal scratch']
  #allocation2 [shape = 'f32[1,128]{1,0:T(1,128)}', space=vmem, size = 0x200, scoped, tag = 'scratch operand']
  #allocation3 [shape = 'f32[1,128]{1,0:T(1,128)}', space=vmem, size = 0x200, scoped, tag = 'scratch operand']
  %s0 = inlined_call_operand.vmem [shape: bf16[2,18,72], index: 0, kind: input, shape index: {}]
  %s1 = inlined_call_operand.vmem [shape: bf16[9,64,128], index: 1, kind: input, shape index: {}]
  %s2 = inlined_call_operand.vmem [shape: f32[1,8], index: 2, kind: input, shape index: {}]
  %s3 = inlined_call_operand.vmem [shape: f32[1,8], index: 3, kind: input, shape index: {}]
  %s4 = inlined_call_operand.vmem [shape: bf16[2,16,128], index: 4, kind: output, shape index: {0}]
  %s5 = inlined_call_operand.vmem [shape: f32[1,8], index: 5, kind: output, shape index: {1}]
  %s6 = inlined_call_operand.vmem [shape: f32[1,8], index: 6, kind: output, shape index: {2}]
  %7 = xla_tuple %s4, %s5, %s6
  %s8 = sld [smem:[#allocation0]]
  $region50: #{basic_block_forward.2} parent=0
    _
  %s10 = ssub.s32 1, %s8
  %s11 = scalar_select 0, %s10, %s8
  // Predicated region
  $region2: #{basic_block_forward.2} parent=0 // pred_check
    _
  $region3: #{basic_block_forward.2} parent=0 // pred_check_branch
    %13 = sbr.rel (0) target = $region5
  $region4: #{basic_block_forward.2} parent=0 // pred_region
    _
  $region5: #{basic_block_forward.2} parent=0 // pred_fallthru
    _
  // Predicated region
  $region6: #{basic_block_forward.2} parent=0 // pred_check
    _
  $region7: #{basic_block_forward.2} parent=0 // pred_check_branch
    %15 = sbr.rel (0) target = $region9
  $region8: #{basic_block_forward.2} parent=0 // pred_region
    _
  $region9: #{basic_block_forward.2} parent=0 // pred_fallthru
    _
  // Predicated region
  $region10: #{basic_block_forward.2} parent=0 // pred_check
    _
  $region11: #{basic_block_forward.2} parent=0 // pred_check_branch
    %17 = sbr.rel (0) target = $region13
  $region12: #{basic_block_forward.2} parent=0 // pred_region
    _
  $region13: #{basic_block_forward.2} parent=0 // pred_fallthru
    _
  // Predicated region
  $region14: #{basic_block_forward.2} parent=0 // pred_check
    _
  $region15: #{basic_block_forward.2} parent=0 // pred_check_branch
    %19 = sbr.rel (0) target = $region17
  $region16: #{basic_block_forward.2} parent=0 // pred_region
    _
  $region17: #{basic_block_forward.2} parent=0 // pred_fallthru
    _
  %p21 = scmp.eq.s32.totalorder 0, 0
  // Predicated region
  $region18: #{basic_block_forward.2} parent=0 // pred_check
    %p22 = pneg %p21
  $region19: #{basic_block_forward.2} parent=0 // pred_check_branch
    %24 = sbr.rel (%p22) target = $region21
  $region20: #{basic_block_forward.2} parent=0 // pred_region
    %25 = vst [vmem:[#allocation2] sm:$0x1] 0.0
    %26 = vst [vmem:[#allocation3] sm:$0x1] 0.0
  $region21: #{basic_block_forward.2} parent=0 // pred_fallthru
    _
  %v27 = vld [vmem:[%s0] sm:$0xf]
  %v28 = vld [vmem:[%s0 + $0x4] sm:$0xf]
  %v29 = vld [vmem:[%s0 + $0x8] sm:$0x1]
  %v30 = vld [vmem:[%s1] sm:$0xf]
  %v31 = vld [vmem:[%s1 + $0x4] sm:$0xf]
  %v32 = vld [vmem:[%s1 + $0x8] sm:$0xf]
  %v33 = vld [vmem:[%s1 + $0xc] sm:$0xf]
  %v34 = vld [vmem:[%s1 + $0x10] sm:$0xf]
  %v35 = vld [vmem:[%s1 + $0x14] sm:$0xf]
  %v36 = vld [vmem:[%s1 + $0x18] sm:$0xf]
  %v37 = vld [vmem:[%s1 + $0x1c] sm:$0xf]
  %s38 = scalar_lea.vmem %s1, 32
  %v39 = vld [vmem:[%s38] sm:$0xf]
  %v40 = vld [vmem:[%s38 + $0x4] sm:$0xf]
  %v41 = vld [vmem:[%s38 + $0x8] sm:$0xf]
  %v42 = vld [vmem:[%s38 + $0xc] sm:$0xf]
  %v43 = vld [vmem:[%s38 + $0x10] sm:$0xf]
  %v44 = vld [vmem:[%s38 + $0x14] sm:$0xf]
  %v45 = vld [vmem:[%s38 + $0x18] sm:$0xf]
  %v46 = vld [vmem:[%s38 + $0x1c] sm:$0xf]
  %v49 = vunpack.c.l.b16 %v27
  %v50 = vunpack.c.l.b16 %v28
  %v51 = vpack.c.b16 %v50, %v49
  %52 = vrot.lane.b32.xlu0 %v51, 124
  %v53 = vpop.permute.xlu0 %52
  %v62 = vunpack.c.l.b16 %v39
  %v63 = vunpack.c.l.b16 %v40
  %v64 = vunpack.c.l.b16 %v41
  %v65 = vunpack.c.l.b16 %v42
  %v66 = vunpack.c.l.b16 %v43
  %v67 = vunpack.c.l.b16 %v44
  %v68 = vunpack.c.l.b16 %v45
  %v69 = vunpack.c.l.b16 %v46
  %v70 = vpack.c.b16 %v63, %v62
  %v71 = vpack.c.b16 %v65, %v64
  %v72 = vpack.c.b16 %v67, %v66
  %v73 = vpack.c.b16 %v69, %v68
  %vm78 = vcmask 523264
  %v80 = vsel %vm78, %v53, 0
  %82 = vmatprep.subr.bf16.mxu0 0
  %83 = vmatpush1.bf16.msra.mxu0 %v70
  %84 = vmatprep.subr.bf16.mxu0 0
  %85 = vmatpush1.bf16.msra.mxu0 %v71
  %86 = vmatprep.subr.bf16.mxu0 0
  %87 = vmatpush1.bf16.msra.mxu0 %v72
  %88 = vmatprep.subr.bf16.mxu0 0
  %89 = vmatpush1.bf16.msra.mxu0 %v73
  %90 = vmatprep.subr.bf16.mxu0 0
  %91 = vmatpush1.bf16.msra.mxu0 0
  %92 = vmatprep.subr.bf16.mxu0 0
  %93 = vmatpush1.bf16.msra.mxu0 0
  %94 = vmatprep.subr.bf16.mxu0 0
  %95 = vmatpush1.bf16.msra.mxu0 0
  %96 = vmatprep.subr.bf16.mxu0 0
  %97 = vmatpush1.bf16.msra.mxu0 0
  %98 = vmatprep.subr.bf16.mxu0 0
  %99 = vmatpush1.bf16.msra.mxu0 0
  %100 = vmatprep.subr.bf16.mxu0 0
  %101 = vmatpush1.bf16.msra.mxu0 0
  %102 = vmatprep.subr.bf16.mxu0 0
  %103 = vmatpush1.bf16.msra.mxu0 0
  %104 = vmatprep.subr.bf16.mxu0 0
  %105 = vmatpush1.bf16.msra.mxu0 0
  %106 = vmatprep.subr.bf16.mxu0 0
  %107 = vmatpush1.bf16.msra.mxu0 0
  %108 = vmatprep.subr.bf16.mxu0 0
  %109 = vmatpush1.bf16.msra.mxu0 0
  %110 = vmatprep.subr.bf16.mxu0 0
  %111 = vmatpush1.bf16.msra.mxu0 0
  %112 = vmatprep.subr.bf16.mxu0 0
  %113 = vmatpush1.bf16.msra.mxu0 0
  %114 = vmatprep.mubr.bf16.mxu0 0
  %115 = vmatmul.mubr.bf16.gmra.mrb[0].mxu0 %v80
  %v116 = vpop.f32.mrb[0].mxu0
  %v117 = vadd.f32 0.0, %v116
  %v118 = vpop.f32.mrb[0].mxu0
  %v119 = vpop.f32.mrb[0].mxu0
  %v120 = vadd.f32 0.0, %v119
  %v121 = vpop.f32.mrb[0].mxu0
  %122 = vdwg.mxu0
  %v131 = vunpack.c.l.b16 %v30
  %v132 = vunpack.c.l.b16 %v31
  %v133 = vunpack.c.l.b16 %v32
  %v134 = vunpack.c.l.b16 %v33
  %v135 = vunpack.c.l.b16 %v34
  %v136 = vunpack.c.l.b16 %v35
  %v137 = vunpack.c.l.b16 %v36
  %v138 = vunpack.c.l.b16 %v37
  %v139 = vpack.c.b16 %v132, %v131
  %v140 = vpack.c.b16 %v134, %v133
  %v141 = vpack.c.b16 %v136, %v135
  %v142 = vpack.c.b16 %v138, %v137
  %v148 = vsel %vm78, %v51, 0
  %150 = vmatprep.subr.bf16.mxu0 0
  %151 = vmatpush1.bf16.msra.mxu0 %v139
  %152 = vmatprep.subr.bf16.mxu0 0
  %153 = vmatpush1.bf16.msra.mxu0 %v140
  %154 = vmatprep.subr.bf16.mxu0 0
  %155 = vmatpush1.bf16.msra.mxu0 %v141
  %156 = vmatprep.subr.bf16.mxu0 0
  %157 = vmatpush1.bf16.msra.mxu0 %v142
  %158 = vmatprep.subr.bf16.mxu0 0
  %159 = vmatpush1.bf16.msra.mxu0 0
  %160 = vmatprep.subr.bf16.mxu0 0
  %161 = vmatpush1.bf16.msra.mxu0 0
  %162 = vmatprep.subr.bf16.mxu0 0
  %163 = vmatpush1.bf16.msra.mxu0 0
  %164 = vmatprep.subr.bf16.mxu0 0
  %165 = vmatpush1.bf16.msra.mxu0 0
  %166 = vmatprep.subr.bf16.mxu0 0
  %167 = vmatpush1.bf16.msra.mxu0 0
  %168 = vmatprep.subr.bf16.mxu0 0
  %169 = vmatpush1.bf16.msra.mxu0 0
  %170 = vmatprep.subr.bf16.mxu0 0
  %171 = vmatpush1.bf16.msra.mxu0 0
  %172 = vmatprep.subr.bf16.mxu0 0
  %173 = vmatpush1.bf16.msra.mxu0 0
  %174 = vmatprep.subr.bf16.mxu0 0
  %175 = vmatpush1.bf16.msra.mxu0 0
  %176 = vmatprep.subr.bf16.mxu0 0
  %177 = vmatpush1.bf16.msra.mxu0 0
  %178 = vmatprep.subr.bf16.mxu0 0
  %179 = vmatpush1.bf16.msra.mxu0 0
  %180 = vmatprep.subr.bf16.mxu0 0
  %181 = vmatpush1.bf16.msra.mxu0 0
  %182 = vmatprep.mubr.bf16.mxu0 0
  %183 = vmatmul.mubr.bf16.gmra.mrb[0].mxu0 %v148
  %v184 = vpop.f32.mrb[0].mxu0
  %v185 = vadd.f32 %v117, %v184
  %v186 = vpop.f32.mrb[0].mxu0
  %v187 = vpop.f32.mrb[0].mxu0
  %v188 = vadd.f32 %v120, %v187
  %v189 = vpop.f32.mrb[0].mxu0
  %190 = vdwg.mxu0
  %s191 = scalar_lea.vmem %s1, 64
  %v192 = vld [vmem:[%s191] sm:$0xf]
  %v193 = vld [vmem:[%s191 + $0x4] sm:$0xf]
  %v194 = vld [vmem:[%s191 + $0x8] sm:$0xf]
  %v195 = vld [vmem:[%s191 + $0xc] sm:$0xf]
  %v196 = vld [vmem:[%s191 + $0x10] sm:$0xf]
  %v197 = vld [vmem:[%s191 + $0x14] sm:$0xf]
  %v198 = vld [vmem:[%s191 + $0x18] sm:$0xf]
  %v199 = vld [vmem:[%s191 + $0x1c] sm:$0xf]
  %200 = vrot.lane.b32.xlu0 %v51, 120
  %v201 = vpop.permute.xlu0 %200
  %v210 = vunpack.c.l.b16 %v192
  %v211 = vunpack.c.l.b16 %v193
  %v212 = vunpack.c.l.b16 %v194
  %v213 = vunpack.c.l.b16 %v195
  %v214 = vunpack.c.l.b16 %v196
  %v215 = vunpack.c.l.b16 %v197
  %v216 = vunpack.c.l.b16 %v198
  %v217 = vunpack.c.l.b16 %v199
  %v218 = vpack.c.b16 %v211, %v210
  %v219 = vpack.c.b16 %v213, %v212
  %v220 = vpack.c.b16 %v215, %v214
  %v221 = vpack.c.b16 %v217, %v216
  %v227 = vsel %vm78, %v201, 0
  %229 = vmatprep.subr.bf16.mxu0 0
  %230 = vmatpush1.bf16.msra.mxu0 %v218
  %231 = vmatprep.subr.bf16.mxu0 0
  %232 = vmatpush1.bf16.msra.mxu0 %v219
  %233 = vmatprep.subr.bf16.mxu0 0
  %234 = vmatpush1.bf16.msra.mxu0 %v220
  %235 = vmatprep.subr.bf16.mxu0 0
  %236 = vmatpush1.bf16.msra.mxu0 %v221
  %237 = vmatprep.subr.bf16.mxu0 0
  %238 = vmatpush1.bf16.msra.mxu0 0
  %239 = vmatprep.subr.bf16.mxu0 0
  %240 = vmatpush1.bf16.msra.mxu0 0
  %241 = vmatprep.subr.bf16.mxu0 0
  %242 = vmatpush1.bf16.msra.mxu0 0
  %243 = vmatprep.subr.bf16.mxu0 0
  %244 = vmatpush1.bf16.msra.mxu0 0
  %245 = vmatprep.subr.bf16.mxu0 0
  %246 = vmatpush1.bf16.msra.mxu0 0
  %247 = vmatprep.subr.bf16.mxu0 0
  %248 = vmatpush1.bf16.msra.mxu0 0
  %249 = vmatprep.subr.bf16.mxu0 0
  %250 = vmatpush1.bf16.msra.mxu0 0
  %251 = vmatprep.subr.bf16.mxu0 0
  %252 = vmatpush1.bf16.msra.mxu0 0
  %253 = vmatprep.subr.bf16.mxu0 0
  %254 = vmatpush1.bf16.msra.mxu0 0
  %255 = vmatprep.subr.bf16.mxu0 0
  %256 = vmatpush1.bf16.msra.mxu0 0
  %257 = vmatprep.subr.bf16.mxu0 0
  %258 = vmatpush1.bf16.msra.mxu0 0
  %259 = vmatprep.subr.bf16.mxu0 0
  %260 = vmatpush1.bf16.msra.mxu0 0
  %261 = vmatprep.mubr.bf16.mxu0 0
  %262 = vmatmul.mubr.bf16.gmra.mrb[0].mxu0 %v227
  %v263 = vpop.f32.mrb[0].mxu0
  %v264 = vadd.f32 0.0, %v263
  %v265 = vpop.f32.mrb[0].mxu0
  %v266 = vpop.f32.mrb[0].mxu0
  %v267 = vadd.f32 0.0, %v266
  %v268 = vpop.f32.mrb[0].mxu0
  %269 = vdwg.mxu0
  %v270 = vadd.f32 %v185, %v264
  %v271 = vadd.f32 %v188, %v267
  %s272 = scalar_lea.vmem %s1, 96
  %v273 = vld [vmem:[%s272] sm:$0xf]
  %v274 = vld [vmem:[%s272 + $0x4] sm:$0xf]
  %v275 = vld [vmem:[%s272 + $0x8] sm:$0xf]
  %v276 = vld [vmem:[%s272 + $0xc] sm:$0xf]
  %v277 = vld [vmem:[%s272 + $0x10] sm:$0xf]
  %v278 = vld [vmem:[%s272 + $0x14] sm:$0xf]
  %v279 = vld [vmem:[%s272 + $0x18] sm:$0xf]
  %v280 = vld [vmem:[%s272 + $0x1c] sm:$0xf]
  %v282 = vunpack.c.l.b16 %v29
  %v283 = vpack.c.b16 %v282, %v282
  %vm284 = vsmask.f32 7424
  %v285 = vshrl.u32 %v51, 16
  %v287 = vshll.u32 %v51, 16
  %v289 = vrot.slane %v287, 1
  %v290 = vor.u32 %v285, %v289
  %v292 = vshll.u32 %v283, 16
  %v294 = vrot.slane %v292, 1
  %v295 = vsel %vm284, %v290, %v294
  %v304 = vunpack.c.l.b16 %v273
  %v305 = vunpack.c.l.b16 %v274
  %v306 = vunpack.c.l.b16 %v275
  %v307 = vunpack.c.l.b16 %v276
  %v308 = vunpack.c.l.b16 %v277
  %v309 = vunpack.c.l.b16 %v278
  %v310 = vunpack.c.l.b16 %v279
  %v311 = vunpack.c.l.b16 %v280
  %v312 = vpack.c.b16 %v305, %v304
  %v313 = vpack.c.b16 %v307, %v306
  %v314 = vpack.c.b16 %v309, %v308
  %v315 = vpack.c.b16 %v311, %v310
  %v321 = vsel %vm78, %v295, 0
  %323 = vmatprep.subr.bf16.mxu0 0
  %324 = vmatpush1.bf16.msra.mxu0 %v312
  %325 = vmatprep.subr.bf16.mxu0 0
  %326 = vmatpush1.bf16.msra.mxu0 %v313
  %327 = vmatprep.subr.bf16.mxu0 0
  %328 = vmatpush1.bf16.msra.mxu0 %v314
  %329 = vmatprep.subr.bf16.mxu0 0
  %330 = vmatpush1.bf16.msra.mxu0 %v315
  %331 = vmatprep.subr.bf16.mxu0 0
  %332 = vmatpush1.bf16.msra.mxu0 0
  %333 = vmatprep.subr.bf16.mxu0 0
  %334 = vmatpush1.bf16.msra.mxu0 0
  %335 = vmatprep.subr.bf16.mxu0 0
  %336 = vmatpush1.bf16.msra.mxu0 0
  %337 = vmatprep.subr.bf16.mxu0 0
  %338 = vmatpush1.bf16.msra.mxu0 0
  %339 = vmatprep.subr.bf16.mxu0 0
  %340 = vmatpush1.bf16.msra.mxu0 0
  %341 = vmatprep.subr.bf16.mxu0 0
  %342 = vmatpush1.bf16.msra.mxu0 0
  %343 = vmatprep.subr.bf16.mxu0 0
  %344 = vmatpush1.bf16.msra.mxu0 0
  %345 = vmatprep.subr.bf16.mxu0 0
  %346 = vmatpush1.bf16.msra.mxu0 0
  %347 = vmatprep.subr.bf16.mxu0 0
  %348 = vmatpush1.bf16.msra.mxu0 0
  %349 = vmatprep.subr.bf16.mxu0 0
  %350 = vmatpush1.bf16.msra.mxu0 0
  %351 = vmatprep.subr.bf16.mxu0 0
  %352 = vmatpush1.bf16.msra.mxu0 0
  %353 = vmatprep.subr.bf16.mxu0 0
  %354 = vmatpush1.bf16.msra.mxu0 0
  %355 = vmatprep.mubr.bf16.mxu0 0
  %356 = vmatmul.mubr.bf16.gmra.mrb[0].mxu0 %v321
  %v357 = vpop.f32.mrb[0].mxu0
  %v358 = vadd.f32 0.0, %v357
  %v359 = vpop.f32.mrb[0].mxu0
  %v360 = vpop.f32.mrb[0].mxu0
  %v361 = vadd.f32 0.0, %v360
  %v362 = vpop.f32.mrb[0].mxu0
  %363 = vdwg.mxu0
  %v364 = vadd.f32 %v270, %v358
  %v365 = vadd.f32 %v271, %v361
  %s366 = scalar_lea.vmem %s1, 128
  %v367 = vld [vmem:[%s366] sm:$0xf]
  %v368 = vld [vmem:[%s366 + $0x4] sm:$0xf]
  %v369 = vld [vmem:[%s366 + $0x8] sm:$0xf]
  %v370 = vld [vmem:[%s366 + $0xc] sm:$0xf]
  %v371 = vld [vmem:[%s366 + $0x10] sm:$0xf]
  %v372 = vld [vmem:[%s366 + $0x14] sm:$0xf]
  %v373 = vld [vmem:[%s366 + $0x18] sm:$0xf]
  %v374 = vld [vmem:[%s366 + $0x1c] sm:$0xf]
  %375 = vrot.lane.b32.xlu0 %v295, 124
  %v376 = vpop.permute.xlu0 %375
  %v385 = vunpack.c.l.b16 %v367
  %v386 = vunpack.c.l.b16 %v368
  %v387 = vunpack.c.l.b16 %v369
  %v388 = vunpack.c.l.b16 %v370
  %v389 = vunpack.c.l.b16 %v371
  %v390 = vunpack.c.l.b16 %v372
  %v391 = vunpack.c.l.b16 %v373
  %v392 = vunpack.c.l.b16 %v374
  %v393 = vpack.c.b16 %v386, %v385
  %v394 = vpack.c.b16 %v388, %v387
  %v395 = vpack.c.b16 %v390, %v389
  %v396 = vpack.c.b16 %v392, %v391
  %v402 = vsel %vm78, %v376, 0
  %404 = vmatprep.subr.bf16.mxu0 0
  %405 = vmatpush1.bf16.msra.mxu0 %v393
  %406 = vmatprep.subr.bf16.mxu0 0
  %407 = vmatpush1.bf16.msra.mxu0 %v394
  %408 = vmatprep.subr.bf16.mxu0 0
  %409 = vmatpush1.bf16.msra.mxu0 %v395
  %410 = vmatprep.subr.bf16.mxu0 0
  %411 = vmatpush1.bf16.msra.mxu0 %v396
  %412 = vmatprep.subr.bf16.mxu0 0
  %413 = vmatpush1.bf16.msra.mxu0 0
  %414 = vmatprep.subr.bf16.mxu0 0
  %415 = vmatpush1.bf16.msra.mxu0 0
  %416 = vmatprep.subr.bf16.mxu0 0
  %417 = vmatpush1.bf16.msra.mxu0 0
  %418 = vmatprep.subr.bf16.mxu0 0
  %419 = vmatpush1.bf16.msra.mxu0 0
  %420 = vmatprep.subr.bf16.mxu0 0
  %421 = vmatpush1.bf16.msra.mxu0 0
  %422 = vmatprep.subr.bf16.mxu0 0
  %423 = vmatpush1.bf16.msra.mxu0 0
  %424 = vmatprep.subr.bf16.mxu0 0
  %425 = vmatpush1.bf16.msra.mxu0 0
  %426 = vmatprep.subr.bf16.mxu0 0
  %427 = vmatpush1.bf16.msra.mxu0 0
  %428 = vmatprep.subr.bf16.mxu0 0
  %429 = vmatpush1.bf16.msra.mxu0 0
  %430 = vmatprep.subr.bf16.mxu0 0
  %431 = vmatpush1.bf16.msra.mxu0 0
  %432 = vmatprep.subr.bf16.mxu0 0
  %433 = vmatpush1.bf16.msra.mxu0 0
  %434 = vmatprep.subr.bf16.mxu0 0
  %435 = vmatpush1.bf16.msra.mxu0 0
  %436 = vmatprep.mubr.bf16.mxu0 0
  %437 = vmatmul.mubr.bf16.gmra.mrb[0].mxu0 %v402
  %v438 = vpop.f32.mrb[0].mxu0
  %v439 = vadd.f32 0.0, %v438
  %v440 = vpop.f32.mrb[0].mxu0
  %v441 = vpop.f32.mrb[0].mxu0
  %v442 = vadd.f32 0.0, %v441
  %v443 = vpop.f32.mrb[0].mxu0
  %444 = vdwg.mxu0
  %v445 = vadd.f32 %v364, %v439
  %v446 = vadd.f32 %v365, %v442
  %s447 = scalar_lea.vmem %s1, 160
  %v448 = vld [vmem:[%s447] sm:$0xf]
  %v449 = vld [vmem:[%s447 + $0x4] sm:$0xf]
  %v450 = vld [vmem:[%s447 + $0x8] sm:$0xf]
  %v451 = vld [vmem:[%s447 + $0xc] sm:$0xf]
  %v452 = vld [vmem:[%s447 + $0x10] sm:$0xf]
  %v453 = vld [vmem:[%s447 + $0x14] sm:$0xf]
  %v454 = vld [vmem:[%s447 + $0x18] sm:$0xf]
  %v455 = vld [vmem:[%s447 + $0x1c] sm:$0xf]
  %456 = vrot.lane.b32.xlu0 %v295, 120
  %v457 = vpop.permute.xlu0 %456
  %v466 = vunpack.c.l.b16 %v448
  %v467 = vunpack.c.l.b16 %v449
  %v468 = vunpack.c.l.b16 %v450
  %v469 = vunpack.c.l.b16 %v451
  %v470 = vunpack.c.l.b16 %v452
  %v471 = vunpack.c.l.b16 %v453
  %v472 = vunpack.c.l.b16 %v454
  %v473 = vunpack.c.l.b16 %v455
  %v474 = vpack.c.b16 %v467, %v466
  %v475 = vpack.c.b16 %v469, %v468
  %v476 = vpack.c.b16 %v471, %v470
  %v477 = vpack.c.b16 %v473, %v472
  %v483 = vsel %vm78, %v457, 0
  %485 = vmatprep.subr.bf16.mxu0 0
  %486 = vmatpush1.bf16.msra.mxu0 %v474
  %487 = vmatprep.subr.bf16.mxu0 0
  %488 = vmatpush1.bf16.msra.mxu0 %v475
  %489 = vmatprep.subr.bf16.mxu0 0
  %490 = vmatpush1.bf16.msra.mxu0 %v476
  %491 = vmatprep.subr.bf16.mxu0 0
  %492 = vmatpush1.bf16.msra.mxu0 %v477
  %493 = vmatprep.subr.bf16.mxu0 0
  %494 = vmatpush1.bf16.msra.mxu0 0
  %495 = vmatprep.subr.bf16.mxu0 0
  %496 = vmatpush1.bf16.msra.mxu0 0
  %497 = vmatprep.subr.bf16.mxu0 0
  %498 = vmatpush1.bf16.msra.mxu0 0
  %499 = vmatprep.subr.bf16.mxu0 0
  %500 = vmatpush1.bf16.msra.mxu0 0
  %501 = vmatprep.subr.bf16.mxu0 0
  %502 = vmatpush1.bf16.msra.mxu0 0
  %503 = vmatprep.subr.bf16.mxu0 0
  %504 = vmatpush1.bf16.msra.mxu0 0
  %505 = vmatprep.subr.bf16.mxu0 0
  %506 = vmatpush1.bf16.msra.mxu0 0
  %507 = vmatprep.subr.bf16.mxu0 0
  %508 = vmatpush1.bf16.msra.mxu0 0
  %509 = vmatprep.subr.bf16.mxu0 0
  %510 = vmatpush1.bf16.msra.mxu0 0
  %511 = vmatprep.subr.bf16.mxu0 0
  %512 = vmatpush1.bf16.msra.mxu0 0
  %513 = vmatprep.subr.bf16.mxu0 0
  %514 = vmatpush1.bf16.msra.mxu0 0
  %515 = vmatprep.subr.bf16.mxu0 0
  %516 = vmatpush1.bf16.msra.mxu0 0
  %517 = vmatprep.mubr.bf16.mxu0 0
  %518 = vmatmul.mubr.bf16.gmra.mrb[0].mxu0 %v483
  %v519 = vpop.f32.mrb[0].mxu0
  %v520 = vadd.f32 0.0, %v519
  %v521 = vpop.f32.mrb[0].mxu0
  %v522 = vpop.f32.mrb[0].mxu0
  %v523 = vadd.f32 0.0, %v522
  %v524 = vpop.f32.mrb[0].mxu0
  %525 = vdwg.mxu0
  %v526 = vadd.f32 %v445, %v520
  %v527 = vadd.f32 %v446, %v523
  %s528 = scalar_lea.vmem %s1, 192
  %v529 = vld [vmem:[%s528] sm:$0xf]
  %v530 = vld [vmem:[%s528 + $0x4] sm:$0xf]
  %v531 = vld [vmem:[%s528 + $0x8] sm:$0xf]
  %v532 = vld [vmem:[%s528 + $0xc] sm:$0xf]
  %v533 = vld [vmem:[%s528 + $0x10] sm:$0xf]
  %v534 = vld [vmem:[%s528 + $0x14] sm:$0xf]
  %v535 = vld [vmem:[%s528 + $0x18] sm:$0xf]
  %v536 = vld [vmem:[%s528 + $0x1c] sm:$0xf]
  %vm537 = vcmask 1046528
  %v538 = vrot.slane %v51, 1
  %v539 = vrot.slane %v283, 1
  %v540 = vsel %vm537, %v538, %v539
  %v549 = vunpack.c.l.b16 %v529
  %v550 = vunpack.c.l.b16 %v530
  %v551 = vunpack.c.l.b16 %v531
  %v552 = vunpack.c.l.b16 %v532
  %v553 = vunpack.c.l.b16 %v533
  %v554 = vunpack.c.l.b16 %v534
  %v555 = vunpack.c.l.b16 %v535
  %v556 = vunpack.c.l.b16 %v536
  %v557 = vpack.c.b16 %v550, %v549
  %v558 = vpack.c.b16 %v552, %v551
  %v559 = vpack.c.b16 %v554, %v553
  %v560 = vpack.c.b16 %v556, %v555
  %v566 = vsel %vm78, %v540, 0
  %568 = vmatprep.subr.bf16.mxu0 0
  %569 = vmatpush1.bf16.msra.mxu0 %v557
  %570 = vmatprep.subr.bf16.mxu0 0
  %571 = vmatpush1.bf16.msra.mxu0 %v558
  %572 = vmatprep.subr.bf16.mxu0 0
  %573 = vmatpush1.bf16.msra.mxu0 %v559
  %574 = vmatprep.subr.bf16.mxu0 0
  %575 = vmatpush1.bf16.msra.mxu0 %v560
  %576 = vmatprep.subr.bf16.mxu0 0
  %577 = vmatpush1.bf16.msra.mxu0 0
  %578 = vmatprep.subr.bf16.mxu0 0
  %579 = vmatpush1.bf16.msra.mxu0 0
  %580 = vmatprep.subr.bf16.mxu0 0
  %581 = vmatpush1.bf16.msra.mxu0 0
  %582 = vmatprep.subr.bf16.mxu0 0
  %583 = vmatpush1.bf16.msra.mxu0 0
  %584 = vmatprep.subr.bf16.mxu0 0
  %585 = vmatpush1.bf16.msra.mxu0 0
  %586 = vmatprep.subr.bf16.mxu0 0
  %587 = vmatpush1.bf16.msra.mxu0 0
  %588 = vmatprep.subr.bf16.mxu0 0
  %589 = vmatpush1.bf16.msra.mxu0 0
  %590 = vmatprep.subr.bf16.mxu0 0
  %591 = vmatpush1.bf16.msra.mxu0 0
  %592 = vmatprep.subr.bf16.mxu0 0
  %593 = vmatpush1.bf16.msra.mxu0 0
  %594 = vmatprep.subr.bf16.mxu0 0
  %595 = vmatpush1.bf16.msra.mxu0 0
  %596 = vmatprep.subr.bf16.mxu0 0
  %597 = vmatpush1.bf16.msra.mxu0 0
  %598 = vmatprep.subr.bf16.mxu0 0
  %599 = vmatpush1.bf16.msra.mxu0 0
  %600 = vmatprep.mubr.bf16.mxu0 0
  %601 = vmatmul.mubr.bf16.gmra.mrb[0].mxu0 %v566
  %v602 = vpop.f32.mrb[0].mxu0
  %v603 = vadd.f32 0.0, %v602
  %v604 = vpop.f32.mrb[0].mxu0
  %v605 = vpop.f32.mrb[0].mxu0
  %v606 = vadd.f32 0.0, %v605
  %v607 = vpop.f32.mrb[0].mxu0
  %608 = vdwg.mxu0
  %v609 = vadd.f32 %v526, %v603
  %v610 = vadd.f32 %v527, %v606
  %s611 = scalar_lea.vmem %s1, 224
  %v612 = vld [vmem:[%s611] sm:$0xf]
  %v613 = vld [vmem:[%s611 + $0x4] sm:$0xf]
  %v614 = vld [vmem:[%s611 + $0x8] sm:$0xf]
  %v615 = vld [vmem:[%s611 + $0xc] sm:$0xf]
  %v616 = vld [vmem:[%s611 + $0x10] sm:$0xf]
  %v617 = vld [vmem:[%s611 + $0x14] sm:$0xf]
  %v618 = vld [vmem:[%s611 + $0x18] sm:$0xf]
  %v619 = vld [vmem:[%s611 + $0x1c] sm:$0xf]
  %620 = vrot.lane.b32.xlu0 %v540, 124
  %v621 = vpop.permute.xlu0 %620
  %v630 = vunpack.c.l.b16 %v612
  %v631 = vunpack.c.l.b16 %v613
  %v632 = vunpack.c.l.b16 %v614
  %v633 = vunpack.c.l.b16 %v615
  %v634 = vunpack.c.l.b16 %v616
  %v635 = vunpack.c.l.b16 %v617
  %v636 = vunpack.c.l.b16 %v618
  %v637 = vunpack.c.l.b16 %v619
  %v638 = vpack.c.b16 %v631, %v630
  %v639 = vpack.c.b16 %v633, %v632
  %v640 = vpack.c.b16 %v635, %v634
  %v641 = vpack.c.b16 %v637, %v636
  %v647 = vsel %vm78, %v621, 0
  %649 = vmatprep.subr.bf16.mxu0 0
  %650 = vmatpush1.bf16.msra.mxu0 %v638
  %651 = vmatprep.subr.bf16.mxu0 0
  %652 = vmatpush1.bf16.msra.mxu0 %v639
  %653 = vmatprep.subr.bf16.mxu0 0
  %654 = vmatpush1.bf16.msra.mxu0 %v640
  %655 = vmatprep.subr.bf16.mxu0 0
  %656 = vmatpush1.bf16.msra.mxu0 %v641
  %657 = vmatprep.subr.bf16.mxu0 0
  %658 = vmatpush1.bf16.msra.mxu0 0
  %659 = vmatprep.subr.bf16.mxu0 0
  %660 = vmatpush1.bf16.msra.mxu0 0
  %661 = vmatprep.subr.bf16.mxu0 0
  %662 = vmatpush1.bf16.msra.mxu0 0
  %663 = vmatprep.subr.bf16.mxu0 0
  %664 = vmatpush1.bf16.msra.mxu0 0
  %665 = vmatprep.subr.bf16.mxu0 0
  %666 = vmatpush1.bf16.msra.mxu0 0
  %667 = vmatprep.subr.bf16.mxu0 0
  %668 = vmatpush1.bf16.msra.mxu0 0
  %669 = vmatprep.subr.bf16.mxu0 0
  %670 = vmatpush1.bf16.msra.mxu0 0
  %671 = vmatprep.subr.bf16.mxu0 0
  %672 = vmatpush1.bf16.msra.mxu0 0
  %673 = vmatprep.subr.bf16.mxu0 0
  %674 = vmatpush1.bf16.msra.mxu0 0
  %675 = vmatprep.subr.bf16.mxu0 0
  %676 = vmatpush1.bf16.msra.mxu0 0
  %677 = vmatprep.subr.bf16.mxu0 0
  %678 = vmatpush1.bf16.msra.mxu0 0
  %679 = vmatprep.subr.bf16.mxu0 0
  %680 = vmatpush1.bf16.msra.mxu0 0
  %681 = vmatprep.mubr.bf16.mxu0 0
  %682 = vmatmul.mubr.bf16.gmra.mrb[0].mxu0 %v647
  %v683 = vpop.f32.mrb[0].mxu0
  %v684 = vadd.f32 0.0, %v683
  %v685 = vpop.f32.mrb[0].mxu0
  %v686 = vpop.f32.mrb[0].mxu0
  %v687 = vadd.f32 0.0, %v686
  %v688 = vpop.f32.mrb[0].mxu0
  %689 = vdwg.mxu0
  %v690 = vadd.f32 %v609, %v684
  %v691 = vadd.f32 %v610, %v687
  %s692 = scalar_lea.vmem %s1, 256
  %v693 = vld [vmem:[%s692] sm:$0xf]
  %v694 = vld [vmem:[%s692 + $0x4] sm:$0xf]
  %v695 = vld [vmem:[%s692 + $0x8] sm:$0xf]
  %v696 = vld [vmem:[%s692 + $0xc] sm:$0xf]
  %v697 = vld [vmem:[%s692 + $0x10] sm:$0xf]
  %v698 = vld [vmem:[%s692 + $0x14] sm:$0xf]
  %v699 = vld [vmem:[%s692 + $0x18] sm:$0xf]
  %v700 = vld [vmem:[%s692 + $0x1c] sm:$0xf]
  %701 = vrot.lane.b32.xlu0 %v540, 120
  %v702 = vpop.permute.xlu0 %701
  %v711 = vunpack.c.l.b16 %v693
  %v712 = vunpack.c.l.b16 %v694
  %v713 = vunpack.c.l.b16 %v695
  %v714 = vunpack.c.l.b16 %v696
  %v715 = vunpack.c.l.b16 %v697
  %v716 = vunpack.c.l.b16 %v698
  %v717 = vunpack.c.l.b16 %v699
  %v718 = vunpack.c.l.b16 %v700
  %v719 = vpack.c.b16 %v712, %v711
  %v720 = vpack.c.b16 %v714, %v713
  %v721 = vpack.c.b16 %v716, %v715
  %v722 = vpack.c.b16 %v718, %v717
  %v728 = vsel %vm78, %v702, 0
  %730 = vmatprep.subr.bf16.mxu0 0
  %731 = vmatpush1.bf16.msra.mxu0 %v719
  %732 = vmatprep.subr.bf16.mxu0 0
  %733 = vmatpush1.bf16.msra.mxu0 %v720
  %734 = vmatprep.subr.bf16.mxu0 0
  %735 = vmatpush1.bf16.msra.mxu0 %v721
  %736 = vmatprep.subr.bf16.mxu0 0
  %737 = vmatpush1.bf16.msra.mxu0 %v722
  %738 = vmatprep.subr.bf16.mxu0 0
  %739 = vmatpush1.bf16.msra.mxu0 0
  %740 = vmatprep.subr.bf16.mxu0 0
  %741 = vmatpush1.bf16.msra.mxu0 0
  %742 = vmatprep.subr.bf16.mxu0 0
  %743 = vmatpush1.bf16.msra.mxu0 0
  %744 = vmatprep.subr.bf16.mxu0 0
  %745 = vmatpush1.bf16.msra.mxu0 0
  %746 = vmatprep.subr.bf16.mxu0 0
  %747 = vmatpush1.bf16.msra.mxu0 0
  %748 = vmatprep.subr.bf16.mxu0 0
  %749 = vmatpush1.bf16.msra.mxu0 0
  %750 = vmatprep.subr.bf16.mxu0 0
  %751 = vmatpush1.bf16.msra.mxu0 0
  %752 = vmatprep.subr.bf16.mxu0 0
  %753 = vmatpush1.bf16.msra.mxu0 0
  %754 = vmatprep.subr.bf16.mxu0 0
  %755 = vmatpush1.bf16.msra.mxu0 0
  %756 = vmatprep.subr.bf16.mxu0 0
  %757 = vmatpush1.bf16.msra.mxu0 0
  %758 = vmatprep.subr.bf16.mxu0 0
  %759 = vmatpush1.bf16.msra.mxu0 0
  %760 = vmatprep.subr.bf16.mxu0 0
  %761 = vmatpush1.bf16.msra.mxu0 0
  %762 = vmatprep.mubr.bf16.mxu0 0
  %763 = vmatmul.mubr.bf16.gmra.mrb[0].mxu0 %v728
  %v764 = vpop.f32.mrb[0].mxu0
  %v765 = vadd.f32 0.0, %v764
  %v766 = vpop.f32.mrb[0].mxu0
  %v767 = vpop.f32.mrb[0].mxu0
  %v768 = vadd.f32 0.0, %v767
  %v769 = vpop.f32.mrb[0].mxu0
  %770 = vdwg.mxu0
  %v771 = vadd.f32 %v690, %v765
  %v772 = vadd.f32 %v691, %v768
  %v773 = vld [vmem:[#allocation2] sm:$0x1]
  %v774 = vadd.f32 %v771, %v772
  %v775 = vrot.slane %v774, 4
  %v776 = vadd.f32 %v774, %v775
  %v777 = vrot.slane %v776, 2
  %v778 = vadd.f32 %v776, %v777
  %v779 = vrot.slane %v778, 1
  %v780 = vadd.f32 %v778, %v779
  %v781 = vadd.f32 %v773, %v780
  %782 = vst [vmem:[#allocation2] sm:$0x1] %v781
  %v783 = vld [vmem:[#allocation3] sm:$0x1]
  %v784 = vmul.f32 %v771, %v771
  %v785 = vmul.f32 %v772, %v772
  %v786 = vadd.f32 %v784, %v785
  %v787 = vrot.slane %v786, 4
  %v788 = vadd.f32 %v786, %v787
  %v789 = vrot.slane %v788, 2
  %v790 = vadd.f32 %v788, %v789
  %v791 = vrot.slane %v790, 1
  %v792 = vadd.f32 %v790, %v791
  %v793 = vadd.f32 %v783, %v792
  %794 = vst [vmem:[#allocation3] sm:$0x1] %v793
  %v795 = vpack.c.bf16 %v772, %v771
  %v797 = vunpack.c.l.b16 %v795
  %v798 = vunpack.c.h.b16 %v795
  %v799 = vpack.c.b16 %v797, %v797
  %v800 = vpack.c.b16 %v798, %v798
  %803 = vst [vmem:[%s4] sm:$0xf] %v799
  %804 = vst [vmem:[%s4 + $0x4] sm:$0xf] %v800
  %s805 = scalar_lea.vmem %s0, 12
  %v806 = vld [vmem:[%s805] sm:$0xf]
  %v807 = vld [vmem:[%s805 + $0x4] sm:$0xf]
  %v808 = vld [vmem:[%s805 + $0x8] sm:$0x1]
  %v809 = vld [vmem:[%s1] sm:$0xf]
  %v810 = vld [vmem:[%s1 + $0x4] sm:$0xf]
  %v811 = vld [vmem:[%s1 + $0x8] sm:$0xf]
  %v812 = vld [vmem:[%s1 + $0xc] sm:$0xf]
  %v813 = vld [vmem:[%s1 + $0x10] sm:$0xf]
  %v814 = vld [vmem:[%s1 + $0x14] sm:$0xf]
  %v815 = vld [vmem:[%s1 + $0x18] sm:$0xf]
  %v816 = vld [vmem:[%s1 + $0x1c] sm:$0xf]
  %v817 = vld [vmem:[%s38] sm:$0xf]
  %v818 = vld [vmem:[%s38 + $0x4] sm:$0xf]
  %v819 = vld [vmem:[%s38 + $0x8] sm:$0xf]
  %v820 = vld [vmem:[%s38 + $0xc] sm:$0xf]
  %v821 = vld [vmem:[%s38 + $0x10] sm:$0xf]
  %v822 = vld [vmem:[%s38 + $0x14] sm:$0xf]
  %v823 = vld [vmem:[%s38 + $0x18] sm:$0xf]
  %v824 = vld [vmem:[%s38 + $0x1c] sm:$0xf]
  %v827 = vunpack.c.l.b16 %v806
  %v828 = vunpack.c.l.b16 %v807
  %v829 = vpack.c.b16 %v828, %v827
  %830 = vrot.lane.b32.xlu0 %v829, 124
  %v831 = vpop.permute.xlu0 %830
  %v840 = vunpack.c.l.b16 %v817
  %v841 = vunpack.c.l.b16 %v818
  %v842 = vunpack.c.l.b16 %v819
  %v843 = vunpack.c.l.b16 %v820
  %v844 = vunpack.c.l.b16 %v821
  %v845 = vunpack.c.l.b16 %v822
  %v846 = vunpack.c.l.b16 %v823
  %v847 = vunpack.c.l.b16 %v824
  %v848 = vpack.c.b16 %v841, %v840
  %v849 = vpack.c.b16 %v843, %v842
  %v850 = vpack.c.b16 %v845, %v844
  %v851 = vpack.c.b16 %v847, %v846
  %v857 = vsel %vm78, %v831, 0
  %859 = vmatprep.subr.bf16.mxu0 0
  %860 = vmatpush1.bf16.msra.mxu0 %v848
  %861 = vmatprep.subr.bf16.mxu0 0
  %862 = vmatpush1.bf16.msra.mxu0 %v849
  %863 = vmatprep.subr.bf16.mxu0 0
  %864 = vmatpush1.bf16.msra.mxu0 %v850
  %865 = vmatprep.subr.bf16.mxu0 0
  %866 = vmatpush1.bf16.msra.mxu0 %v851
  %867 = vmatprep.subr.bf16.mxu0 0
  %868 = vmatpush1.bf16.msra.mxu0 0
  %869 = vmatprep.subr.bf16.mxu0 0
  %870 = vmatpush1.bf16.msra.mxu0 0
  %871 = vmatprep.subr.bf16.mxu0 0
  %872 = vmatpush1.bf16.msra.mxu0 0
  %873 = vmatprep.subr.bf16.mxu0 0
  %874 = vmatpush1.bf16.msra.mxu0 0
  %875 = vmatprep.subr.bf16.mxu0 0
  %876 = vmatpush1.bf16.msra.mxu0 0
  %877 = vmatprep.subr.bf16.mxu0 0
  %878 = vmatpush1.bf16.msra.mxu0 0
  %879 = vmatprep.subr.bf16.mxu0 0
  %880 = vmatpush1.bf16.msra.mxu0 0
  %881 = vmatprep.subr.bf16.mxu0 0
  %882 = vmatpush1.bf16.msra.mxu0 0
  %883 = vmatprep.subr.bf16.mxu0 0
  %884 = vmatpush1.bf16.msra.mxu0 0
  %885 = vmatprep.subr.bf16.mxu0 0
  %886 = vmatpush1.bf16.msra.mxu0 0
  %887 = vmatprep.subr.bf16.mxu0 0
  %888 = vmatpush1.bf16.msra.mxu0 0
  %889 = vmatprep.subr.bf16.mxu0 0
  %890 = vmatpush1.bf16.msra.mxu0 0
  %891 = vmatprep.mubr.bf16.mxu0 0
  %892 = vmatmul.mubr.bf16.gmra.mrb[0].mxu0 %v857
  %v893 = vpop.f32.mrb[0].mxu0
  %v894 = vadd.f32 0.0, %v893
  %v895 = vpop.f32.mrb[0].mxu0
  %v896 = vpop.f32.mrb[0].mxu0
  %v897 = vadd.f32 0.0, %v896
  %v898 = vpop.f32.mrb[0].mxu0
  %899 = vdwg.mxu0
  %v908 = vunpack.c.l.b16 %v809
  %v909 = vunpack.c.l.b16 %v810
  %v910 = vunpack.c.l.b16 %v811
  %v911 = vunpack.c.l.b16 %v812
  %v912 = vunpack.c.l.b16 %v813
  %v913 = vunpack.c.l.b16 %v814
  %v914 = vunpack.c.l.b16 %v815
  %v915 = vunpack.c.l.b16 %v816
  %v916 = vpack.c.b16 %v909, %v908
  %v917 = vpack.c.b16 %v911, %v910
  %v918 = vpack.c.b16 %v913, %v912
  %v919 = vpack.c.b16 %v915, %v914
  %v925 = vsel %vm78, %v829, 0
  %927 = vmatprep.subr.bf16.mxu0 0
  %928 = vmatpush1.bf16.msra.mxu0 %v916
  %929 = vmatprep.subr.bf16.mxu0 0
  %930 = vmatpush1.bf16.msra.mxu0 %v917
  %931 = vmatprep.subr.bf16.mxu0 0
  %932 = vmatpush1.bf16.msra.mxu0 %v918
  %933 = vmatprep.subr.bf16.mxu0 0
  %934 = vmatpush1.bf16.msra.mxu0 %v919
  %935 = vmatprep.subr.bf16.mxu0 0
  %936 = vmatpush1.bf16.msra.mxu0 0
  %937 = vmatprep.subr.bf16.mxu0 0
  %938 = vmatpush1.bf16.msra.mxu0 0
  %939 = vmatprep.subr.bf16.mxu0 0
  %940 = vmatpush1.bf16.msra.mxu0 0
  %941 = vmatprep.subr.bf16.mxu0 0
  %942 = vmatpush1.bf16.msra.mxu0 0
  %943 = vmatprep.subr.bf16.mxu0 0
  %944 = vmatpush1.bf16.msra.mxu0 0
  %945 = vmatprep.subr.bf16.mxu0 0
  %946 = vmatpush1.bf16.msra.mxu0 0
  %947 = vmatprep.subr.bf16.mxu0 0
  %948 = vmatpush1.bf16.msra.mxu0 0
  %949 = vmatprep.subr.bf16.mxu0 0
  %950 = vmatpush1.bf16.msra.mxu0 0
  %951 = vmatprep.subr.bf16.mxu0 0
  %952 = vmatpush1.bf16.msra.mxu0 0
  %953 = vmatprep.subr.bf16.mxu0 0
  %954 = vmatpush1.bf16.msra.mxu0 0
  %955 = vmatprep.subr.bf16.mxu0 0
  %956 = vmatpush1.bf16.msra.mxu0 0
  %957 = vmatprep.subr.bf16.mxu0 0
  %958 = vmatpush1.bf16.msra.mxu0 0
  %959 = vmatprep.mubr.bf16.mxu0 0
  %960 = vmatmul.mubr.bf16.gmra.mrb[0].mxu0 %v925
  %v961 = vpop.f32.mrb[0].mxu0
  %v962 = vadd.f32 %v894, %v961
  %v963 = vpop.f32.mrb[0].mxu0
  %v964 = vpop.f32.mrb[0].mxu0
  %v965 = vadd.f32 %v897, %v964
  %v966 = vpop.f32.mrb[0].mxu0
  %967 = vdwg.mxu0
  %v968 = vld [vmem:[%s191] sm:$0xf]
  %v969 = vld [vmem:[%s191 + $0x4] sm:$0xf]
  %v970 = vld [vmem:[%s191 + $0x8] sm:$0xf]
  %v971 = vld [vmem:[%s191 + $0xc] sm:$0xf]
  %v972 = vld [vmem:[%s191 + $0x10] sm:$0xf]
  %v973 = vld [vmem:[%s191 + $0x14] sm:$0xf]
  %v974 = vld [vmem:[%s191 + $0x18] sm:$0xf]
  %v975 = vld [vmem:[%s191 + $0x1c] sm:$0xf]
  %976 = vrot.lane.b32.xlu0 %v829, 120
  %v977 = vpop.permute.xlu0 %976
  %v986 = vunpack.c.l.b16 %v968
  %v987 = vunpack.c.l.b16 %v969
  %v988 = vunpack.c.l.b16 %v970
  %v989 = vunpack.c.l.b16 %v971
  %v990 = vunpack.c.l.b16 %v972
  %v991 = vunpack.c.l.b16 %v973
  %v992 = vunpack.c.l.b16 %v974
  %v993 = vunpack.c.l.b16 %v975
  %v994 = vpack.c.b16 %v987, %v986
  %v995 = vpack.c.b16 %v989, %v988
  %v996 = vpack.c.b16 %v991, %v990
  %v997 = vpack.c.b16 %v993, %v992
  %v1003 = vsel %vm78, %v977, 0
  %1005 = vmatprep.subr.bf16.mxu0 0
  %1006 = vmatpush1.bf16.msra.mxu0 %v994
  %1007 = vmatprep.subr.bf16.mxu0 0
  %1008 = vmatpush1.bf16.msra.mxu0 %v995
  %1009 = vmatprep.subr.bf16.mxu0 0
  %1010 = vmatpush1.bf16.msra.mxu0 %v996
  %1011 = vmatprep.subr.bf16.mxu0 0
  %1012 = vmatpush1.bf16.msra.mxu0 %v997
  %1013 = vmatprep.subr.bf16.mxu0 0
  %1014 = vmatpush1.bf16.msra.mxu0 0
  %1015 = vmatprep.subr.bf16.mxu0 0
  %1016 = vmatpush1.bf16.msra.mxu0 0
  %1017 = vmatprep.subr.bf16.mxu0 0
  %1018 = vmatpush1.bf16.msra.mxu0 0
  %1019 = vmatprep.subr.bf16.mxu0 0
  %1020 = vmatpush1.bf16.msra.mxu0 0
  %1021 = vmatprep.subr.bf16.mxu0 0
  %1022 = vmatpush1.bf16.msra.mxu0 0
  %1023 = vmatprep.subr.bf16.mxu0 0
  %1024 = vmatpush1.bf16.msra.mxu0 0
  %1025 = vmatprep.subr.bf16.mxu0 0
  %1026 = vmatpush1.bf16.msra.mxu0 0
  %1027 = vmatprep.subr.bf16.mxu0 0
  %1028 = vmatpush1.bf16.msra.mxu0 0
  %1029 = vmatprep.subr.bf16.mxu0 0
  %1030 = vmatpush1.bf16.msra.mxu0 0
  %1031 = vmatprep.subr.bf16.mxu0 0
  %1032 = vmatpush1.bf16.msra.mxu0 0
  %1033 = vmatprep.subr.bf16.mxu0 0
  %1034 = vmatpush1.bf16.msra.mxu0 0
  %1035 = vmatprep.subr.bf16.mxu0 0
  %1036 = vmatpush1.bf16.msra.mxu0 0
  %1037 = vmatprep.mubr.bf16.mxu0 0
  %1038 = vmatmul.mubr.bf16.gmra.mrb[0].mxu0 %v1003
  %v1039 = vpop.f32.mrb[0].mxu0
  %v1040 = vadd.f32 0.0, %v1039
  %v1041 = vpop.f32.mrb[0].mxu0
  %v1042 = vpop.f32.mrb[0].mxu0
  %v1043 = vadd.f32 0.0, %v1042
  %v1044 = vpop.f32.mrb[0].mxu0
  %1045 = vdwg.mxu0
  %v1046 = vadd.f32 %v962, %v1040
  %v1047 = vadd.f32 %v965, %v1043
  %v1048 = vld [vmem:[%s272] sm:$0xf]
  %v1049 = vld [vmem:[%s272 + $0x4] sm:$0xf]
  %v1050 = vld [vmem:[%s272 + $0x8] sm:$0xf]
  %v1051 = vld [vmem:[%s272 + $0xc] sm:$0xf]
  %v1052 = vld [vmem:[%s272 + $0x10] sm:$0xf]
  %v1053 = vld [vmem:[%s272 + $0x14] sm:$0xf]
  %v1054 = vld [vmem:[%s272 + $0x18] sm:$0xf]
  %v1055 = vld [vmem:[%s272 + $0x1c] sm:$0xf]
  %v1057 = vunpack.c.l.b16 %v808
  %v1058 = vpack.c.b16 %v1057, %v1057
  %v1059 = vshrl.u32 %v829, 16
  %v1061 = vshll.u32 %v829, 16
  %v1063 = vrot.slane %v1061, 1
  %v1064 = vor.u32 %v1059, %v1063
  %v1066 = vshll.u32 %v1058, 16
  %v1068 = vrot.slane %v1066, 1
  %v1069 = vsel %vm284, %v1064, %v1068
  %v1078 = vunpack.c.l.b16 %v1048
  %v1079 = vunpack.c.l.b16 %v1049
  %v1080 = vunpack.c.l.b16 %v1050
  %v1081 = vunpack.c.l.b16 %v1051
  %v1082 = vunpack.c.l.b16 %v1052
  %v1083 = vunpack.c.l.b16 %v1053
  %v1084 = vunpack.c.l.b16 %v1054
  %v1085 = vunpack.c.l.b16 %v1055
  %v1086 = vpack.c.b16 %v1079, %v1078
  %v1087 = vpack.c.b16 %v1081, %v1080
  %v1088 = vpack.c.b16 %v1083, %v1082
  %v1089 = vpack.c.b16 %v1085, %v1084
  %v1095 = vsel %vm78, %v1069, 0
  %1097 = vmatprep.subr.bf16.mxu0 0
  %1098 = vmatpush1.bf16.msra.mxu0 %v1086
  %1099 = vmatprep.subr.bf16.mxu0 0
  %1100 = vmatpush1.bf16.msra.mxu0 %v1087
  %1101 = vmatprep.subr.bf16.mxu0 0
  %1102 = vmatpush1.bf16.msra.mxu0 %v1088
  %1103 = vmatprep.subr.bf16.mxu0 0
  %1104 = vmatpush1.bf16.msra.mxu0 %v1089
  %1105 = vmatprep.subr.bf16.mxu0 0
  %1106 = vmatpush1.bf16.msra.mxu0 0
  %1107 = vmatprep.subr.bf16.mxu0 0
  %1108 = vmatpush1.bf16.msra.mxu0 0
  %1109 = vmatprep.subr.bf16.mxu0 0
  %1110 = vmatpush1.bf16.msra.mxu0 0
  %1111 = vmatprep.subr.bf16.mxu0 0
  %1112 = vmatpush1.bf16.msra.mxu0 0
  %1113 = vmatprep.subr.bf16.mxu0 0
  %1114 = vmatpush1.bf16.msra.mxu0 0
  %1115 = vmatprep.subr.bf16.mxu0 0
  %1116 = vmatpush1.bf16.msra.mxu0 0
  %1117 = vmatprep.subr.bf16.mxu0 0
  %1118 = vmatpush1.bf16.msra.mxu0 0
  %1119 = vmatprep.subr.bf16.mxu0 0
  %1120 = vmatpush1.bf16.msra.mxu0 0
  %1121 = vmatprep.subr.bf16.mxu0 0
  %1122 = vmatpush1.bf16.msra.mxu0 0
  %1123 = vmatprep.subr.bf16.mxu0 0
  %1124 = vmatpush1.bf16.msra.mxu0 0
  %1125 = vmatprep.subr.bf16.mxu0 0
  %1126 = vmatpush1.bf16.msra.mxu0 0
  %1127 = vmatprep.subr.bf16.mxu0 0
  %1128 = vmatpush1.bf16.msra.mxu0 0
  %1129 = vmatprep.mubr.bf16.mxu0 0
  %1130 = vmatmul.mubr.bf16.gmra.mrb[0].mxu0 %v1095
  %v1131 = vpop.f32.mrb[0].mxu0
  %v1132 = vadd.f32 0.0, %v1131
  %v1133 = vpop.f32.mrb[0].mxu0
  %v1134 = vpop.f32.mrb[0].mxu0
  %v1135 = vadd.f32 0.0, %v1134
  %v1136 = vpop.f32.mrb[0].mxu0
  %1137 = vdwg.mxu0
  %v1138 = vadd.f32 %v1046, %v1132
  %v1139 = vadd.f32 %v1047, %v1135
  %v1140 = vld [vmem:[%s366] sm:$0xf]
  %v1141 = vld [vmem:[%s366 + $0x4] sm:$0xf]
  %v1142 = vld [vmem:[%s366 + $0x8] sm:$0xf]
  %v1143 = vld [vmem:[%s366 + $0xc] sm:$0xf]
  %v1144 = vld [vmem:[%s366 + $0x10] sm:$0xf]
  %v1145 = vld [vmem:[%s366 + $0x14] sm:$0xf]
  %v1146 = vld [vmem:[%s366 + $0x18] sm:$0xf]
  %v1147 = vld [vmem:[%s366 + $0x1c] sm:$0xf]
  %1148 = vrot.lane.b32.xlu0 %v1069, 124
  %v1149 = vpop.permute.xlu0 %1148
  %v1158 = vunpack.c.l.b16 %v1140
  %v1159 = vunpack.c.l.b16 %v1141
  %v1160 = vunpack.c.l.b16 %v1142
  %v1161 = vunpack.c.l.b16 %v1143
  %v1162 = vunpack.c.l.b16 %v1144
  %v1163 = vunpack.c.l.b16 %v1145
  %v1164 = vunpack.c.l.b16 %v1146
  %v1165 = vunpack.c.l.b16 %v1147
  %v1166 = vpack.c.b16 %v1159, %v1158
  %v1167 = vpack.c.b16 %v1161, %v1160
  %v1168 = vpack.c.b16 %v1163, %v1162
  %v1169 = vpack.c.b16 %v1165, %v1164
  %v1175 = vsel %vm78, %v1149, 0
  %1177 = vmatprep.subr.bf16.mxu0 0
  %1178 = vmatpush1.bf16.msra.mxu0 %v1166
  %1179 = vmatprep.subr.bf16.mxu0 0
  %1180 = vmatpush1.bf16.msra.mxu0 %v1167
  %1181 = vmatprep.subr.bf16.mxu0 0
  %1182 = vmatpush1.bf16.msra.mxu0 %v1168
  %1183 = vmatprep.subr.bf16.mxu0 0
  %1184 = vmatpush1.bf16.msra.mxu0 %v1169
  %1185 = vmatprep.subr.bf16.mxu0 0
  %1186 = vmatpush1.bf16.msra.mxu0 0
  %1187 = vmatprep.subr.bf16.mxu0 0
  %1188 = vmatpush1.bf16.msra.mxu0 0
  %1189 = vmatprep.subr.bf16.mxu0 0
  %1190 = vmatpush1.bf16.msra.mxu0 0
  %1191 = vmatprep.subr.bf16.mxu0 0
  %1192 = vmatpush1.bf16.msra.mxu0 0
  %1193 = vmatprep.subr.bf16.mxu0 0
  %1194 = vmatpush1.bf16.msra.mxu0 0
  %1195 = vmatprep.subr.bf16.mxu0 0
  %1196 = vmatpush1.bf16.msra.mxu0 0
  %1197 = vmatprep.subr.bf16.mxu0 0
  %1198 = vmatpush1.bf16.msra.mxu0 0
  %1199 = vmatprep.subr.bf16.mxu0 0
  %1200 = vmatpush1.bf16.msra.mxu0 0
  %1201 = vmatprep.subr.bf16.mxu0 0
  %1202 = vmatpush1.bf16.msra.mxu0 0
  %1203 = vmatprep.subr.bf16.mxu0 0
  %1204 = vmatpush1.bf16.msra.mxu0 0
  %1205 = vmatprep.subr.bf16.mxu0 0
  %1206 = vmatpush1.bf16.msra.mxu0 0
  %1207 = vmatprep.subr.bf16.mxu0 0
  %1208 = vmatpush1.bf16.msra.mxu0 0
  %1209 = vmatprep.mubr.bf16.mxu0 0
  %1210 = vmatmul.mubr.bf16.gmra.mrb[0].mxu0 %v1175
  %v1211 = vpop.f32.mrb[0].mxu0
  %v1212 = vadd.f32 0.0, %v1211
  %v1213 = vpop.f32.mrb[0].mxu0
  %v1214 = vpop.f32.mrb[0].mxu0
  %v1215 = vadd.f32 0.0, %v1214
  %v1216 = vpop.f32.mrb[0].mxu0
  %1217 = vdwg.mxu0
  %v1218 = vadd.f32 %v1138, %v1212
  %v1219 = vadd.f32 %v1139, %v1215
  %v1220 = vld [vmem:[%s447] sm:$0xf]
  %v1221 = vld [vmem:[%s447 + $0x4] sm:$0xf]
  %v1222 = vld [vmem:[%s447 + $0x8] sm:$0xf]
  %v1223 = vld [vmem:[%s447 + $0xc] sm:$0xf]
  %v1224 = vld [vmem:[%s447 + $0x10] sm:$0xf]
  %v1225 = vld [vmem:[%s447 + $0x14] sm:$0xf]
  %v1226 = vld [vmem:[%s447 + $0x18] sm:$0xf]
  %v1227 = vld [vmem:[%s447 + $0x1c] sm:$0xf]
  %1228 = vrot.lane.b32.xlu0 %v1069, 120
  %v1229 = vpop.permute.xlu0 %1228
  %v1238 = vunpack.c.l.b16 %v1220
  %v1239 = vunpack.c.l.b16 %v1221
  %v1240 = vunpack.c.l.b16 %v1222
  %v1241 = vunpack.c.l.b16 %v1223
  %v1242 = vunpack.c.l.b16 %v1224
  %v1243 = vunpack.c.l.b16 %v1225
  %v1244 = vunpack.c.l.b16 %v1226
  %v1245 = vunpack.c.l.b16 %v1227
  %v1246 = vpack.c.b16 %v1239, %v1238
  %v1247 = vpack.c.b16 %v1241, %v1240
  %v1248 = vpack.c.b16 %v1243, %v1242
  %v1249 = vpack.c.b16 %v1245, %v1244
  %v1255 = vsel %vm78, %v1229, 0
  %1257 = vmatprep.subr.bf16.mxu0 0
  %1258 = vmatpush1.bf16.msra.mxu0 %v1246
  %1259 = vmatprep.subr.bf16.mxu0 0
  %1260 = vmatpush1.bf16.msra.mxu0 %v1247
  %1261 = vmatprep.subr.bf16.mxu0 0
  %1262 = vmatpush1.bf16.msra.mxu0 %v1248
  %1263 = vmatprep.subr.bf16.mxu0 0
  %1264 = vmatpush1.bf16.msra.mxu0 %v1249
  %1265 = vmatprep.subr.bf16.mxu0 0
  %1266 = vmatpush1.bf16.msra.mxu0 0
  %1267 = vmatprep.subr.bf16.mxu0 0
  %1268 = vmatpush1.bf16.msra.mxu0 0
  %1269 = vmatprep.subr.bf16.mxu0 0
  %1270 = vmatpush1.bf16.msra.mxu0 0
  %1271 = vmatprep.subr.bf16.mxu0 0
  %1272 = vmatpush1.bf16.msra.mxu0 0
  %1273 = vmatprep.subr.bf16.mxu0 0
  %1274 = vmatpush1.bf16.msra.mxu0 0
  %1275 = vmatprep.subr.bf16.mxu0 0
  %1276 = vmatpush1.bf16.msra.mxu0 0
  %1277 = vmatprep.subr.bf16.mxu0 0
  %1278 = vmatpush1.bf16.msra.mxu0 0
  %1279 = vmatprep.subr.bf16.mxu0 0
  %1280 = vmatpush1.bf16.msra.mxu0 0
  %1281 = vmatprep.subr.bf16.mxu0 0
  %1282 = vmatpush1.bf16.msra.mxu0 0
  %1283 = vmatprep.subr.bf16.mxu0 0
  %1284 = vmatpush1.bf16.msra.mxu0 0
  %1285 = vmatprep.subr.bf16.mxu0 0
  %1286 = vmatpush1.bf16.msra.mxu0 0
  %1287 = vmatprep.subr.bf16.mxu0 0
  %1288 = vmatpush1.bf16.msra.mxu0 0
  %1289 = vmatprep.mubr.bf16.mxu0 0
  %1290 = vmatmul.mubr.bf16.gmra.mrb[0].mxu0 %v1255
  %v1291 = vpop.f32.mrb[0].mxu0
  %v1292 = vadd.f32 0.0, %v1291
  %v1293 = vpop.f32.mrb[0].mxu0
  %v1294 = vpop.f32.mrb[0].mxu0
  %v1295 = vadd.f32 0.0, %v1294
  %v1296 = vpop.f32.mrb[0].mxu0
  %1297 = vdwg.mxu0
  %v1298 = vadd.f32 %v1218, %v1292
  %v1299 = vadd.f32 %v1219, %v1295
  %v1300 = vld [vmem:[%s528] sm:$0xf]
  %v1301 = vld [vmem:[%s528 + $0x4] sm:$0xf]
  %v1302 = vld [vmem:[%s528 + $0x8] sm:$0xf]
  %v1303 = vld [vmem:[%s528 + $0xc] sm:$0xf]
  %v1304 = vld [vmem:[%s528 + $0x10] sm:$0xf]
  %v1305 = vld [vmem:[%s528 + $0x14] sm:$0xf]
  %v1306 = vld [vmem:[%s528 + $0x18] sm:$0xf]
  %v1307 = vld [vmem:[%s528 + $0x1c] sm:$0xf]
  %v1308 = vrot.slane %v829, 1
  %v1309 = vrot.slane %v1058, 1
  %v1310 = vsel %vm537, %v1308, %v1309
  %v1319 = vunpack.c.l.b16 %v1300
  %v1320 = vunpack.c.l.b16 %v1301
  %v1321 = vunpack.c.l.b16 %v1302
  %v1322 = vunpack.c.l.b16 %v1303
  %v1323 = vunpack.c.l.b16 %v1304
  %v1324 = vunpack.c.l.b16 %v1305
  %v1325 = vunpack.c.l.b16 %v1306
  %v1326 = vunpack.c.l.b16 %v1307
  %v1327 = vpack.c.b16 %v1320, %v1319
  %v1328 = vpack.c.b16 %v1322, %v1321
  %v1329 = vpack.c.b16 %v1324, %v1323
  %v1330 = vpack.c.b16 %v1326, %v1325
  %v1336 = vsel %vm78, %v1310, 0
  %1338 = vmatprep.subr.bf16.mxu0 0
  %1339 = vmatpush1.bf16.msra.mxu0 %v1327
  %1340 = vmatprep.subr.bf16.mxu0 0
  %1341 = vmatpush1.bf16.msra.mxu0 %v1328
  %1342 = vmatprep.subr.bf16.mxu0 0
  %1343 = vmatpush1.bf16.msra.mxu0 %v1329
  %1344 = vmatprep.subr.bf16.mxu0 0
  %1345 = vmatpush1.bf16.msra.mxu0 %v1330
  %1346 = vmatprep.subr.bf16.mxu0 0
  %1347 = vmatpush1.bf16.msra.mxu0 0
  %1348 = vmatprep.subr.bf16.mxu0 0
  %1349 = vmatpush1.bf16.msra.mxu0 0
  %1350 = vmatprep.subr.bf16.mxu0 0
  %1351 = vmatpush1.bf16.msra.mxu0 0
  %1352 = vmatprep.subr.bf16.mxu0 0
  %1353 = vmatpush1.bf16.msra.mxu0 0
  %1354 = vmatprep.subr.bf16.mxu0 0
  %1355 = vmatpush1.bf16.msra.mxu0 0
  %1356 = vmatprep.subr.bf16.mxu0 0
  %1357 = vmatpush1.bf16.msra.mxu0 0
  %1358 = vmatprep.subr.bf16.mxu0 0
  %1359 = vmatpush1.bf16.msra.mxu0 0
  %1360 = vmatprep.subr.bf16.mxu0 0
  %1361 = vmatpush1.bf16.msra.mxu0 0
  %1362 = vmatprep.subr.bf16.mxu0 0
  %1363 = vmatpush1.bf16.msra.mxu0 0
  %1364 = vmatprep.subr.bf16.mxu0 0
  %1365 = vmatpush1.bf16.msra.mxu0 0
  %1366 = vmatprep.subr.bf16.mxu0 0
  %1367 = vmatpush1.bf16.msra.mxu0 0
  %1368 = vmatprep.subr.bf16.mxu0 0
  %1369 = vmatpush1.bf16.msra.mxu0 0
  %1370 = vmatprep.mubr.bf16.mxu0 0
  %1371 = vmatmul.mubr.bf16.gmra.mrb[0].mxu0 %v1336
  %v1372 = vpop.f32.mrb[0].mxu0
  %v1373 = vadd.f32 0.0, %v1372
  %v1374 = vpop.f32.mrb[0].mxu0
  %v1375 = vpop.f32.mrb[0].mxu0
  %v1376 = vadd.f32 0.0, %v1375
  %v1377 = vpop.f32.mrb[0].mxu0
  %1378 = vdwg.mxu0
  %v1379 = vadd.f32 %v1298, %v1373
  %v1380 = vadd.f32 %v1299, %v1376
  %v1381 = vld [vmem:[%s611] sm:$0xf]
  %v1382 = vld [vmem:[%s611 + $0x4] sm:$0xf]
  %v1383 = vld [vmem:[%s611 + $0x8] sm:$0xf]
  %v1384 = vld [vmem:[%s611 + $0xc] sm:$0xf]
  %v1385 = vld [vmem:[%s611 + $0x10] sm:$0xf]
  %v1386 = vld [vmem:[%s611 + $0x14] sm:$0xf]
  %v1387 = vld [vmem:[%s611 + $0x18] sm:$0xf]
  %v1388 = vld [vmem:[%s611 + $0x1c] sm:$0xf]
  %1389 = vrot.lane.b32.xlu0 %v1310, 124
  %v1390 = vpop.permute.xlu0 %1389
  %v1399 = vunpack.c.l.b16 %v1381
  %v1400 = vunpack.c.l.b16 %v1382
  %v1401 = vunpack.c.l.b16 %v1383
  %v1402 = vunpack.c.l.b16 %v1384
  %v1403 = vunpack.c.l.b16 %v1385
  %v1404 = vunpack.c.l.b16 %v1386
  %v1405 = vunpack.c.l.b16 %v1387
  %v1406 = vunpack.c.l.b16 %v1388
  %v1407 = vpack.c.b16 %v1400, %v1399
  %v1408 = vpack.c.b16 %v1402, %v1401
  %v1409 = vpack.c.b16 %v1404, %v1403
  %v1410 = vpack.c.b16 %v1406, %v1405
  %v1416 = vsel %vm78, %v1390, 0
  %1418 = vmatprep.subr.bf16.mxu0 0
  %1419 = vmatpush1.bf16.msra.mxu0 %v1407
  %1420 = vmatprep.subr.bf16.mxu0 0
  %1421 = vmatpush1.bf16.msra.mxu0 %v1408
  %1422 = vmatprep.subr.bf16.mxu0 0
  %1423 = vmatpush1.bf16.msra.mxu0 %v1409
  %1424 = vmatprep.subr.bf16.mxu0 0
  %1425 = vmatpush1.bf16.msra.mxu0 %v1410
  %1426 = vmatprep.subr.bf16.mxu0 0
  %1427 = vmatpush1.bf16.msra.mxu0 0
  %1428 = vmatprep.subr.bf16.mxu0 0
  %1429 = vmatpush1.bf16.msra.mxu0 0
  %1430 = vmatprep.subr.bf16.mxu0 0
  %1431 = vmatpush1.bf16.msra.mxu0 0
  %1432 = vmatprep.subr.bf16.mxu0 0
  %1433 = vmatpush1.bf16.msra.mxu0 0
  %1434 = vmatprep.subr.bf16.mxu0 0
  %1435 = vmatpush1.bf16.msra.mxu0 0
  %1436 = vmatprep.subr.bf16.mxu0 0
  %1437 = vmatpush1.bf16.msra.mxu0 0
  %1438 = vmatprep.subr.bf16.mxu0 0
  %1439 = vmatpush1.bf16.msra.mxu0 0
  %1440 = vmatprep.subr.bf16.mxu0 0
  %1441 = vmatpush1.bf16.msra.mxu0 0
  %1442 = vmatprep.subr.bf16.mxu0 0
  %1443 = vmatpush1.bf16.msra.mxu0 0
  %1444 = vmatprep.subr.bf16.mxu0 0
  %1445 = vmatpush1.bf16.msra.mxu0 0
  %1446 = vmatprep.subr.bf16.mxu0 0
  %1447 = vmatpush1.bf16.msra.mxu0 0
  %1448 = vmatprep.subr.bf16.mxu0 0
  %1449 = vmatpush1.bf16.msra.mxu0 0
  %1450 = vmatprep.mubr.bf16.mxu0 0
  %1451 = vmatmul.mubr.bf16.gmra.mrb[0].mxu0 %v1416
  %v1452 = vpop.f32.mrb[0].mxu0
  %v1453 = vadd.f32 0.0, %v1452
  %v1454 = vpop.f32.mrb[0].mxu0
  %v1455 = vpop.f32.mrb[0].mxu0
  %v1456 = vadd.f32 0.0, %v1455
  %v1457 = vpop.f32.mrb[0].mxu0
  %1458 = vdwg.mxu0
  %v1459 = vadd.f32 %v1379, %v1453
  %v1460 = vadd.f32 %v1380, %v1456
  %v1461 = vld [vmem:[%s692] sm:$0xf]
  %v1462 = vld [vmem:[%s692 + $0x4] sm:$0xf]
  %v1463 = vld [vmem:[%s692 + $0x8] sm:$0xf]
  %v1464 = vld [vmem:[%s692 + $0xc] sm:$0xf]
  %v1465 = vld [vmem:[%s692 + $0x10] sm:$0xf]
  %v1466 = vld [vmem:[%s692 + $0x14] sm:$0xf]
  %v1467 = vld [vmem:[%s692 + $0x18] sm:$0xf]
  %v1468 = vld [vmem:[%s692 + $0x1c] sm:$0xf]
  %1469 = vrot.lane.b32.xlu0 %v1310, 120
  %v1470 = vpop.permute.xlu0 %1469
  %v1479 = vunpack.c.l.b16 %v1461
  %v1480 = vunpack.c.l.b16 %v1462
  %v1481 = vunpack.c.l.b16 %v1463
  %v1482 = vunpack.c.l.b16 %v1464
  %v1483 = vunpack.c.l.b16 %v1465
  %v1484 = vunpack.c.l.b16 %v1466
  %v1485 = vunpack.c.l.b16 %v1467
  %v1486 = vunpack.c.l.b16 %v1468
  %v1487 = vpack.c.b16 %v1480, %v1479
  %v1488 = vpack.c.b16 %v1482, %v1481
  %v1489 = vpack.c.b16 %v1484, %v1483
  %v1490 = vpack.c.b16 %v1486, %v1485
  %v1496 = vsel %vm78, %v1470, 0
  %1498 = vmatprep.subr.bf16.mxu0 0
  %1499 = vmatpush1.bf16.msra.mxu0 %v1487
  %1500 = vmatprep.subr.bf16.mxu0 0
  %1501 = vmatpush1.bf16.msra.mxu0 %v1488
  %1502 = vmatprep.subr.bf16.mxu0 0
  %1503 = vmatpush1.bf16.msra.mxu0 %v1489
  %1504 = vmatprep.subr.bf16.mxu0 0
  %1505 = vmatpush1.bf16.msra.mxu0 %v1490
  %1506 = vmatprep.subr.bf16.mxu0 0
  %1507 = vmatpush1.bf16.msra.mxu0 0
  %1508 = vmatprep.subr.bf16.mxu0 0
  %1509 = vmatpush1.bf16.msra.mxu0 0
  %1510 = vmatprep.subr.bf16.mxu0 0
  %1511 = vmatpush1.bf16.msra.mxu0 0
  %1512 = vmatprep.subr.bf16.mxu0 0
  %1513 = vmatpush1.bf16.msra.mxu0 0
  %1514 = vmatprep.subr.bf16.mxu0 0
  %1515 = vmatpush1.bf16.msra.mxu0 0
  %1516 = vmatprep.subr.bf16.mxu0 0
  %1517 = vmatpush1.bf16.msra.mxu0 0
  %1518 = vmatprep.subr.bf16.mxu0 0
  %1519 = vmatpush1.bf16.msra.mxu0 0
  %1520 = vmatprep.subr.bf16.mxu0 0
  %1521 = vmatpush1.bf16.msra.mxu0 0
  %1522 = vmatprep.subr.bf16.mxu0 0
  %1523 = vmatpush1.bf16.msra.mxu0 0
  %1524 = vmatprep.subr.bf16.mxu0 0
  %1525 = vmatpush1.bf16.msra.mxu0 0
  %1526 = vmatprep.subr.bf16.mxu0 0
  %1527 = vmatpush1.bf16.msra.mxu0 0
  %1528 = vmatprep.subr.bf16.mxu0 0
  %1529 = vmatpush1.bf16.msra.mxu0 0
  %1530 = vmatprep.mubr.bf16.mxu0 0
  %1531 = vmatmul.mubr.bf16.gmra.mrb[0].mxu0 %v1496
  %v1532 = vpop.f32.mrb[0].mxu0
  %v1533 = vadd.f32 0.0, %v1532
  %v1534 = vpop.f32.mrb[0].mxu0
  %v1535 = vpop.f32.mrb[0].mxu0
  %v1536 = vadd.f32 0.0, %v1535
  %v1537 = vpop.f32.mrb[0].mxu0
  %1538 = vdwg.mxu0
  %v1539 = vadd.f32 %v1459, %v1533
  %v1540 = vadd.f32 %v1460, %v1536
  %v1541 = vld [vmem:[#allocation2] sm:$0x1]
  %v1542 = vadd.f32 %v1539, %v1540
  %v1543 = vrot.slane %v1542, 4
  %v1544 = vadd.f32 %v1542, %v1543
  %v1545 = vrot.slane %v1544, 2
  %v1546 = vadd.f32 %v1544, %v1545
  %v1547 = vrot.slane %v1546, 1
  %v1548 = vadd.f32 %v1546, %v1547
  %v1549 = vadd.f32 %v1541, %v1548
  %1550 = vst [vmem:[#allocation2] sm:$0x1] %v1549
  %v1551 = vld [vmem:[#allocation3] sm:$0x1]
  %v1552 = vmul.f32 %v1539, %v1539
  %v1553 = vmul.f32 %v1540, %v1540
  %v1554 = vadd.f32 %v1552, %v1553
  %v1555 = vrot.slane %v1554, 4
  %v1556 = vadd.f32 %v1554, %v1555
  %v1557 = vrot.slane %v1556, 2
  %v1558 = vadd.f32 %v1556, %v1557
  %v1559 = vrot.slane %v1558, 1
  %v1560 = vadd.f32 %v1558, %v1559
  %v1561 = vadd.f32 %v1551, %v1560
  %1562 = vst [vmem:[#allocation3] sm:$0x1] %v1561
  %v1563 = vpack.c.bf16 %v1540, %v1539
  %v1565 = vunpack.c.l.b16 %v1563
  %v1566 = vunpack.c.h.b16 %v1563
  %v1567 = vpack.c.b16 %v1565, %v1565
  %v1568 = vpack.c.b16 %v1566, %v1566
  %s1571 = scalar_lea.vmem %s4, 8
  %1572 = vst [vmem:[%s1571] sm:$0xf] %v1567
  %1573 = vst [vmem:[%s1571 + $0x4] sm:$0xf] %v1568
  // Predicated region
  $region22: #{basic_block_forward.2} parent=0 // pred_check
    %p1574 = pneg %p21
  $region23: #{basic_block_forward.2} parent=0 // pred_check_branch
    %1576 = sbr.rel (%p1574) target = $region25
  $region24: #{basic_block_forward.2} parent=0 // pred_region
    %v1577 = vld [vmem:[#allocation2] sm:$0x1]
    %v1578 = vld [vmem:[#allocation3] sm:$0x1]
    %v1579 = vadd.f32 %v1577, 0.0
    %v1580 = vadd.f32 %v1578, 0.0
    %1582 = vrot.lane.b32.xlu0 %v1577, 120
    %v1583 = vpop.permute.xlu0 %1582
    %v1585 = vadd.f32 %v1579, %v1583
    %1587 = vrot.lane.b32.xlu0 %v1578, 120
    %v1588 = vpop.permute.xlu0 %1587
    %v1590 = vadd.f32 %v1580, %v1588
    %1591 = vrot.lane.b32.xlu0 %v1577, 112
    %v1592 = vpop.permute.xlu0 %1591
    %v1594 = vadd.f32 %v1585, %v1592
    %1595 = vrot.lane.b32.xlu0 %v1578, 112
    %v1596 = vpop.permute.xlu0 %1595
    %v1598 = vadd.f32 %v1590, %v1596
    %1599 = vrot.lane.b32.xlu0 %v1577, 104
    %v1600 = vpop.permute.xlu0 %1599
    %v1602 = vadd.f32 %v1594, %v1600
    %1603 = vrot.lane.b32.xlu0 %v1578, 104
    %v1604 = vpop.permute.xlu0 %1603
    %v1606 = vadd.f32 %v1598, %v1604
    %1607 = vrot.lane.b32.xlu0 %v1577, 96
    %v1608 = vpop.permute.xlu0 %1607
    %v1610 = vadd.f32 %v1602, %v1608
    %1611 = vrot.lane.b32.xlu0 %v1578, 96
    %v1612 = vpop.permute.xlu0 %1611
    %v1614 = vadd.f32 %v1606, %v1612
    %1615 = vrot.lane.b32.xlu0 %v1577, 88
    %v1616 = vpop.permute.xlu0 %1615
    %v1618 = vadd.f32 %v1610, %v1616
    %1619 = vrot.lane.b32.xlu0 %v1578, 88
    %v1620 = vpop.permute.xlu0 %1619
    %v1622 = vadd.f32 %v1614, %v1620
    %1623 = vrot.lane.b32.xlu0 %v1577, 80
    %v1624 = vpop.permute.xlu0 %1623
    %v1626 = vadd.f32 %v1618, %v1624
    %1627 = vrot.lane.b32.xlu0 %v1578, 80
    %v1628 = vpop.permute.xlu0 %1627
    %v1630 = vadd.f32 %v1622, %v1628
    %1631 = vrot.lane.b32.xlu0 %v1577, 72
    %v1632 = vpop.permute.xlu0 %1631
    %v1634 = vadd.f32 %v1626, %v1632
    %1635 = vrot.lane.b32.xlu0 %v1578, 72
    %v1636 = vpop.permute.xlu0 %1635
    %v1638 = vadd.f32 %v1630, %v1636
    %1639 = vrot.lane.b32.xlu0 %v1577, 64
    %v1640 = vpop.permute.xlu0 %1639
    %v1642 = vadd.f32 %v1634, %v1640
    %1643 = vrot.lane.b32.xlu0 %v1578, 64
    %v1644 = vpop.permute.xlu0 %1643
    %v1646 = vadd.f32 %v1638, %v1644
    %1647 = vrot.lane.b32.xlu0 %v1577, 56
    %v1648 = vpop.permute.xlu0 %1647
    %v1650 = vadd.f32 %v1642, %v1648
    %1651 = vrot.lane.b32.xlu0 %v1578, 56
    %v1652 = vpop.permute.xlu0 %1651
    %v1654 = vadd.f32 %v1646, %v1652
    %1655 = vrot.lane.b32.xlu0 %v1577, 48
    %v1656 = vpop.permute.xlu0 %1655
    %v1658 = vadd.f32 %v1650, %v1656
    %1659 = vrot.lane.b32.xlu0 %v1578, 48
    %v1660 = vpop.permute.xlu0 %1659
    %v1662 = vadd.f32 %v1654, %v1660
    %1663 = vrot.lane.b32.xlu0 %v1577, 40
    %v1664 = vpop.permute.xlu0 %1663
    %v1666 = vadd.f32 %v1658, %v1664
    %1667 = vrot.lane.b32.xlu0 %v1578, 40
    %v1668 = vpop.permute.xlu0 %1667
    %v1670 = vadd.f32 %v1662, %v1668
    %1671 = vrot.lane.b32.xlu0 %v1577, 32
    %v1672 = vpop.permute.xlu0 %1671
    %v1674 = vadd.f32 %v1666, %v1672
    %1675 = vrot.lane.b32.xlu0 %v1578, 32
    %v1676 = vpop.permute.xlu0 %1675
    %v1678 = vadd.f32 %v1670, %v1676
    %1679 = vrot.lane.b32.xlu0 %v1577, 24
    %v1680 = vpop.permute.xlu0 %1679
    %v1682 = vadd.f32 %v1674, %v1680
    %1683 = vrot.lane.b32.xlu0 %v1578, 24
    %v1684 = vpop.permute.xlu0 %1683
    %v1686 = vadd.f32 %v1678, %v1684
    %1687 = vrot.lane.b32.xlu0 %v1577, 16
    %v1688 = vpop.permute.xlu0 %1687
    %v1690 = vadd.f32 %v1682, %v1688
    %1691 = vrot.lane.b32.xlu0 %v1578, 16
    %v1692 = vpop.permute.xlu0 %1691
    %v1694 = vadd.f32 %v1686, %v1692
    %1695 = vrot.lane.b32.xlu0 %v1577, 8
    %v1696 = vpop.permute.xlu0 %1695
    %v1698 = vadd.f32 %v1690, %v1696
    %1699 = vrot.lane.b32.xlu0 %v1578, 8
    %v1700 = vpop.permute.xlu0 %1699
    %v1702 = vadd.f32 %v1694, %v1700
    %v1703 = vmul.f32 %v1698, 0.001953125
    %v1704 = vmul.f32 %v1702, 0.001953125
    %v1705 = vmul.f32 %v1703, %v1703
    %v1706 = vsub.f32 %v1704, %v1705
    %v1707 = vmax.f32 %v1706, 0.0
    %v1708 = vld [vmem:[%s2] sm:$0x1]
    %v1709 = vadd.f32 %v1707, 1e-05
    %v1710 = vrsqrt.pop %v1709
    %v1711 = vmul.f32 %v1708, %v1710
    %vm1712 = vcmask 57344
    %1713 = vst.msk [vmem:[%s5] sm:$0x1] %vm1712, %v1711
    %v1714 = vld [vmem:[%s3] sm:$0x1]
    %v1715 = vmul.f32 %v1703, %v1711
    %v1716 = vsub.f32 %v1714, %v1715
    %1717 = vst.msk [vmem:[%s6] sm:$0x1] %vm1712, %v1716
  $region25: #{basic_block_forward.2} parent=0 // pred_fallthru
    _
  // Predicated region
  $region26: #{basic_block_forward.2} parent=0 // pred_check
    _
  $region27: #{basic_block_forward.2} parent=0 // pred_check_branch
    %1719 = sbr.rel (0) target = $region29
  $region28: #{basic_block_forward.2} parent=0 // pred_region
    _
  $region29: #{basic_block_forward.2} parent=0 // pred_fallthru
    _
  // Predicated region
  $region30: #{basic_block_forward.2} parent=0 // pred_check
    _
  $region31: #{basic_block_forward.2} parent=0 // pred_check_branch
    %1721 = sbr.rel (0) target = $region33
  $region32: #{basic_block_forward.2} parent=0 // pred_region
    _
  $region33: #{basic_block_forward.2} parent=0 // pred_fallthru
    _
  // Predicated region
  $region34: #{basic_block_forward.2} parent=0 // pred_check
    _
  $region35: #{basic_block_forward.2} parent=0 // pred_check_branch
    %1723 = sbr.rel (0) target = $region37
  $region36: #{basic_block_forward.2} parent=0 // pred_region
    _
  $region37: #{basic_block_forward.2} parent=0 // pred_fallthru
    _
  // Predicated region
  $region38: #{basic_block_forward.2} parent=0 // pred_check
    _
  $region39: #{basic_block_forward.2} parent=0 // pred_check_branch
    %1725 = sbr.rel (0) target = $region41
  $region40: #{basic_block_forward.2} parent=0 // pred_region
    _
  $region41: #{basic_block_forward.2} parent=0 // pred_fallthru
    _
  // Predicated region
  $region42: #{basic_block_forward.2} parent=0 // pred_check
    _
  $region43: #{basic_block_forward.2} parent=0 // pred_check_branch
    %1727 = sbr.rel (0) target = $region45
  $region44: #{basic_block_forward.2} parent=0 // pred_region
    _
  $region45: #{basic_block_forward.2} parent=0 // pred_fallthru
    _
  // Predicated region
  $region46: #{basic_block_forward.2} parent=0 // pred_check
    _
  $region47: #{basic_block_forward.2} parent=0 // pred_check_branch
    %1729 = sbr.rel (0) target = $region49
  $region48: #{basic_block_forward.2} parent=0 // pred_region
    _
  $region49: #{basic_block_forward.2} parent=0 // pred_fallthru
    _

</llo_original>
